<compile_context>
chip_gen: v7x
topology: tpu7x:2x2x1
jax: 0.10.0
libtpu: 0.0.40
codegen_flags: <defaults>
</compile_context>

<pallas_src>
import functools

import numpy as np
import jax
import jax.numpy as jnp
from jax.experimental import pallas as pl
from jax.experimental.pallas import tpu as pltpu

# Layer widths: encoder 784->64->32->12->3, decoder 3->12->32->64->784
DIMS = [28 * 28, 64, 32, 12, 3, 12, 32, 64, 28 * 28]
NUM_LAYERS = len(DIMS) - 1          # 8 linear layers
ENC_LAYER = 3                       # Linear(12, 3): encoder output (no activation)
ENC_DIM = DIMS[ENC_LAYER + 1]       # 3
LANE = 128


def _round_up(n, m):
    return ((n + m - 1) // m) * m


# Padded feature widths used for the weight tensors / inner matmuls only.
# Endpoints stay native (784) so x / decoded are read & written with no extra pass.
# PDIMS = [784, 128, 128, 128, 128, 128, 128, 128, 784]
PDIMS = [DIMS[0]] + [_round_up(d, LANE) for d in DIMS[1:-1]] + [DIMS[-1]]


def _autoencoder_kernel(compute_dtype, x_ref, *refs):
    """refs = (w0, b0, ..., w7, b7, enc_ref, dec_ref).

    Weights/biases arrive as float32 (zero-padded to PDIMS); x at native width 784.
    Matmul inputs are cast to `compute_dtype` (bf16 by default); the MXU
    accumulates in f32; bias add and tanh/sigmoid run in f32.
    """
    param_refs = refs[: 2 * NUM_LAYERS]
    enc_ref, dec_ref = refs[2 * NUM_LAYERS], refs[2 * NUM_LAYERS + 1]

    h = x_ref[...].astype(compute_dtype)                      # (tm, 784)
    # Python loop unrolls at trace time: each bias broadcast / weight cast happens
    # exactly once per grid step (keep unrolled — JAX does not CSE broadcast_in_dim
    # inside rolled loops).
    for layer in range(NUM_LAYERS):
        w = param_refs[2 * layer][...].astype(compute_dtype)  # (in_p, out_p)
        b = param_refs[2 * layer + 1][...]                    # (1, out_p) float32
        acc = jnp.dot(h, w, preferred_element_type=jnp.float32) + b
        if layer == ENC_LAYER:
            # Encoder output Linear(12, 3): only the first 3 lanes are real; the
            # padded columns of acc are exactly 0 (zero-padded W cols / b entries).
            enc_ref[...] = acc[:, :ENC_DIM].astype(enc_ref.dtype)
            h = acc.astype(compute_dtype)
        elif layer == NUM_LAYERS - 1:
            # Final decoder layer: Sigmoid (f32 EUP), stored at native width 784.
            dec_ref[...] = jax.nn.sigmoid(acc).astype(dec_ref.dtype)
        else:
            # Hidden layers: Tanh in f32, cast back to the MXU input dtype.
            # tanh(0) == 0 keeps zero-padded columns exactly 0 layer to layer.
            h = jnp.tanh(acc).astype(compute_dtype)


def _choose_tm(B, io_itemsize):
    if B <= 8:
        return B                                   # single full-extent batch block
    cap = 1024 if io_itemsize <= 2 else 512        # keep VMEM working set < ~24 MiB
    # >= 2 (and roughly balanced) grid steps whenever possible so both v7x
    # TensorCores get work under dimension_semantics=("parallel",).
    return min(cap, _round_up(pl.cdiv(B, 2), 8))


def autoencoder_forward(x, params, *, tm=None, compute_dtype=jnp.bfloat16,
                        out_dtype=None):
    """x: (B, 784). params: list of 8 (W:(in,out), b:(1,out)) float32 tuples.

    compute_dtype: MXU input dtype (bf16 default; accumulation is always f32).
      Use jnp.float32 for a near-bit-exact match with an f32 reference.
    out_dtype:     HBM dtype of the outputs (default x.dtype).
    Recommendation (all TPU generations, incl. v5e): pass x as bfloat16 and/or
    out_dtype=jnp.bfloat16 to halve the dominant HBM traffic; weights stay f32.
    Returns (encoded:(B,3), decoded:(B,784)) matching the PyTorch forward.
    """
    B, D_in = x.shape
    assert D_in == DIMS[0]
    out_dtype = x.dtype if out_dtype is None else out_dtype

    if tm is None:
        tm = _choose_tm(B, np.dtype(x.dtype).itemsize)
    grid = (pl.cdiv(B, tm),)

    # x at native width: full-extent last dim -> reads the user array directly.
    in_specs = [pl.BlockSpec((tm, D_in), lambda i: (i, 0))]
    flat_params = []
    for layer in range(NUM_LAYERS):
        w, b = params[layer]
        pin, pout = PDIMS[layer], PDIMS[layer + 1]
        # Weights/biases stay float32 in HBM (tiny, fetched once); zero-pad the
        # hidden dims to lane multiples so inner matmuls are aligned.
        wp = jnp.zeros((pin, pout), jnp.float32).at[: w.shape[0], : w.shape[1]].set(
            w.astype(jnp.float32))
        bp = jnp.zeros((1, pout), jnp.float32).at[:, : b.shape[1]].set(
            b.astype(jnp.float32))
        flat_params.extend([wp, bp])
        # Constant index_map => block stays VMEM-resident across the grid.
        in_specs.append(pl.BlockSpec((pin, pout), lambda i: (0, 0)))
        in_specs.append(pl.BlockSpec((1, pout), lambda i: (0, 0)))

    out_specs = [
        pl.BlockSpec((tm, ENC_DIM), lambda i: (i, 0)),   # encoded (B, 3)
        pl.BlockSpec((tm, DIMS[-1]), lambda i: (i, 0)),  # decoded (B, 784)
    ]
    out_shape = (
        jax.ShapeDtypeStruct((B, ENC_DIM), out_dtype),
        jax.ShapeDtypeStruct((B, DIMS[-1]), out_dtype),
    )

    kernel = functools.partial(_autoencoder_kernel, compute_dtype)
    encoded, decoded = pl.pallas_call(
        kernel,
        grid=grid,
        in_specs=in_specs,
        out_specs=out_specs,
        out_shape=out_shape,
        compiler_params=pltpu.CompilerParams(
            dimension_semantics=("parallel",),       # shard batch tiles across TCs
            vmem_limit_bytes=32 * 1024 * 1024,       # > v5e's 16 MiB scoped default
        ),
    )(x, *flat_params)
    return encoded, decoded


def init_params(key):
    """Deterministic init matching nn.Linear's U(-1/sqrt(fan_in), 1/sqrt(fan_in))."""
    params = []
    for fan_in, fan_out in zip(DIMS[:-1], DIMS[1:]):
        key, kw, kb = jax.random.split(key, 3)
        bound = 1.0 / np.sqrt(fan_in)
        # Stored already transposed: (in, out) so the kernel computes x @ W.
        w = jax.random.uniform(kw, (fan_in, fan_out), jnp.float32, -bound, bound)
        b = jax.random.uniform(kb, (1, fan_out), jnp.float32, -bound, bound)
        params.append((w, b))
    return params


def reference_forward(x, params):
    """Pure-JAX reference mirroring the PyTorch module exactly."""
    h = x
    enc = dec = None
    for layer in range(NUM_LAYERS):
        w, b = params[layer]
        h = h @ w + b
        if layer == ENC_LAYER:
            enc = h
        elif layer == NUM_LAYERS - 1:
            dec = jax.nn.sigmoid(h)
        else:
            h = jnp.tanh(h)
    return enc, dec


if __name__ == "__main__":
    key = jax.random.PRNGKey(0)
    kp, kx = jax.random.split(key)
    params = init_params(kp)

    B = 16
    x = jax.random.uniform(kx, (B, 28 * 28), jnp.float32)
    enc_ref_, dec_ref_ = reference_forward(x, params)

    # ---- default path: f32 I/O, bf16 MXU inputs, f32 accumulation/activations ----
    enc, dec = jax.block_until_ready(autoencoder_forward(x, params))
    assert enc.shape == (B, 3) and dec.shape == (B, 28 * 28)
    np.testing.assert_allclose(np.asarray(enc), np.asarray(enc_ref_),
                               rtol=3e-2, atol=2e-2)
    np.testing.assert_allclose(np.asarray(dec), np.asarray(dec_ref_),
                               rtol=3e-2, atol=2e-2)

    # ---- f32-MXU path on a ragged batch (exercises the partial last grid block) ---
    Br = 13
    xr = x[:Br]
    enc32, dec32 = jax.block_until_ready(
        autoencoder_forward(xr, params, compute_dtype=jnp.float32))
    er, dr = reference_forward(xr, params)
    np.testing.assert_allclose(np.asarray(enc32), np.asarray(er),
                               rtol=1e-4, atol=1e-5)
    np.testing.assert_allclose(np.asarray(dec32), np.asarray(dr),
                               rtol=1e-4, atol=1e-5)

    # ---- bf16 I/O path (recommended on v5e/v6e/v7x to halve HBM traffic) ----------
    xb = x.astype(jnp.bfloat16)
    encb, decb = jax.block_until_ready(
        autoencoder_forward(xb, params, out_dtype=jnp.bfloat16))
    np.testing.assert_allclose(np.asarray(encb, dtype=np.float32),
                               np.asarray(enc_ref_), rtol=5e-2, atol=5e-2)
    np.testing.assert_allclose(np.asarray(decb, dtype=np.float32),
                               np.asarray(dec_ref_), rtol=5e-2, atol=5e-2)

    print("KERNEL_OK")
</pallas_src>

<mosaic_0001>
module attributes {stable_mosaic.version = 11 : i64} {
  func.func @_autoencoder_kernel(%arg0: i32, %arg1: memref<8x784xf32, #tpu.memory_space<vmem>>, %arg2: memref<784x128xf32, #tpu.memory_space<vmem>>, %arg3: memref<1x128xf32, #tpu.memory_space<vmem>>, %arg4: memref<128x128xf32, #tpu.memory_space<vmem>>, %arg5: memref<1x128xf32, #tpu.memory_space<vmem>>, %arg6: memref<128x128xf32, #tpu.memory_space<vmem>>, %arg7: memref<1x128xf32, #tpu.memory_space<vmem>>, %arg8: memref<128x128xf32, #tpu.memory_space<vmem>>, %arg9: memref<1x128xf32, #tpu.memory_space<vmem>>, %arg10: memref<128x128xf32, #tpu.memory_space<vmem>>, %arg11: memref<1x128xf32, #tpu.memory_space<vmem>>, %arg12: memref<128x128xf32, #tpu.memory_space<vmem>>, %arg13: memref<1x128xf32, #tpu.memory_space<vmem>>, %arg14: memref<128x128xf32, #tpu.memory_space<vmem>>, %arg15: memref<1x128xf32, #tpu.memory_space<vmem>>, %arg16: memref<128x784xf32, #tpu.memory_space<vmem>>, %arg17: memref<1x784xf32, #tpu.memory_space<vmem>>, %arg18: memref<8x3xf32, #tpu.memory_space<vmem>>, %arg19: memref<8x784xf32, #tpu.memory_space<vmem>>) attributes {dimension_semantics = [#tpu.dimension_semantics<parallel>], iteration_bounds = array<i64: 2>, scalar_prefetch = 0 : i64, scratch_operands = 0 : i64, tpu.core_type = #tpu.core_type<tc>, window_params = [{transform_indices = @transform_0, window_bounds = array<i64: 8, 784>}, {pipeline_mode = #tpu.pipeline_mode<synchronous>, transform_indices = @transform_1, window_bounds = array<i64: 784, 128>}, {pipeline_mode = #tpu.pipeline_mode<synchronous>, transform_indices = @transform_2, window_bounds = array<i64: 1, 128>}, {pipeline_mode = #tpu.pipeline_mode<synchronous>, transform_indices = @transform_3, window_bounds = array<i64: 128, 128>}, {pipeline_mode = #tpu.pipeline_mode<synchronous>, transform_indices = @transform_4, window_bounds = array<i64: 1, 128>}, {pipeline_mode = #tpu.pipeline_mode<synchronous>, transform_indices = @transform_5, window_bounds = array<i64: 128, 128>}, {pipeline_mode = #tpu.pipeline_mode<synchronous>, transform_indices = @transform_6, window_bounds = array<i64: 1, 128>}, {pipeline_mode = #tpu.pipeline_mode<synchronous>, transform_indices = @transform_7, window_bounds = array<i64: 128, 128>}, {pipeline_mode = #tpu.pipeline_mode<synchronous>, transform_indices = @transform_8, window_bounds = array<i64: 1, 128>}, {pipeline_mode = #tpu.pipeline_mode<synchronous>, transform_indices = @transform_9, window_bounds = array<i64: 128, 128>}, {pipeline_mode = #tpu.pipeline_mode<synchronous>, transform_indices = @transform_10, window_bounds = array<i64: 1, 128>}, {pipeline_mode = #tpu.pipeline_mode<synchronous>, transform_indices = @transform_11, window_bounds = array<i64: 128, 128>}, {pipeline_mode = #tpu.pipeline_mode<synchronous>, transform_indices = @transform_12, window_bounds = array<i64: 1, 128>}, {pipeline_mode = #tpu.pipeline_mode<synchronous>, transform_indices = @transform_13, window_bounds = array<i64: 128, 128>}, {pipeline_mode = #tpu.pipeline_mode<synchronous>, transform_indices = @transform_14, window_bounds = array<i64: 1, 128>}, {pipeline_mode = #tpu.pipeline_mode<synchronous>, transform_indices = @transform_15, window_bounds = array<i64: 128, 784>}, {pipeline_mode = #tpu.pipeline_mode<synchronous>, transform_indices = @transform_16, window_bounds = array<i64: 1, 784>}, {transform_indices = @transform_17, window_bounds = array<i64: 8, 3>}, {transform_indices = @transform_18, window_bounds = array<i64: 8, 784>}]} {
    %c0 = arith.constant 0 : index
    %c0_0 = arith.constant 0 : index
    %0 = vector.load %arg1[%c0, %c0_0] : memref<8x784xf32, #tpu.memory_space<vmem>>, vector<8x784xf32>
    %1 = arith.truncf %0 : vector<8x784xf32> to vector<8x784xbf16>
    %c0_1 = arith.constant 0 : index
    %c0_2 = arith.constant 0 : index
    %2 = vector.load %arg2[%c0_1, %c0_2] : memref<784x128xf32, #tpu.memory_space<vmem>>, vector<784x128xf32>
    %3 = arith.truncf %2 : vector<784x128xf32> to vector<784x128xbf16>
    %c0_3 = arith.constant 0 : index
    %c0_4 = arith.constant 0 : index
    %4 = vector.load %arg3[%c0_3, %c0_4] : memref<1x128xf32, #tpu.memory_space<vmem>>, vector<1x128xf32>
    %cst = arith.constant dense<0.000000e+00> : vector<8x128xf32>
    %5 = tpu.matmul %1, %3, %cst {dimension_numbers = #tpu.dot_dimension_numbers<[1], [0], [0], [1], [0, 0, 1, 1], [], []>} : vector<8x784xbf16>, vector<784x128xbf16>, vector<8x128xf32> -> vector<8x128xf32>
    %6 = vector.broadcast %4 : vector<1x128xf32> to vector<8x128xf32>
    %7 = arith.addf %5, %6 : vector<8x128xf32>
    %8 = math.tanh %7 : vector<8x128xf32>
    %9 = arith.truncf %8 : vector<8x128xf32> to vector<8x128xbf16>
    %c0_5 = arith.constant 0 : index
    %c0_6 = arith.constant 0 : index
    %10 = vector.load %arg4[%c0_5, %c0_6] : memref<128x128xf32, #tpu.memory_space<vmem>>, vector<128x128xf32>
    %11 = arith.truncf %10 : vector<128x128xf32> to vector<128x128xbf16>
    %c0_7 = arith.constant 0 : index
    %c0_8 = arith.constant 0 : index
    %12 = vector.load %arg5[%c0_7, %c0_8] : memref<1x128xf32, #tpu.memory_space<vmem>>, vector<1x128xf32>
    %cst_9 = arith.constant dense<0.000000e+00> : vector<8x128xf32>
    %13 = tpu.matmul %9, %11, %cst_9 {dimension_numbers = #tpu.dot_dimension_numbers<[1], [0], [0], [1], [0, 0, 1, 1], [], []>} : vector<8x128xbf16>, vector<128x128xbf16>, vector<8x128xf32> -> vector<8x128xf32>
    %14 = vector.broadcast %12 : vector<1x128xf32> to vector<8x128xf32>
    %15 = arith.addf %13, %14 : vector<8x128xf32>
    %16 = math.tanh %15 : vector<8x128xf32>
    %17 = arith.truncf %16 : vector<8x128xf32> to vector<8x128xbf16>
    %c0_10 = arith.constant 0 : index
    %c0_11 = arith.constant 0 : index
    %18 = vector.load %arg6[%c0_10, %c0_11] : memref<128x128xf32, #tpu.memory_space<vmem>>, vector<128x128xf32>
    %19 = arith.truncf %18 : vector<128x128xf32> to vector<128x128xbf16>
    %c0_12 = arith.constant 0 : index
    %c0_13 = arith.constant 0 : index
    %20 = vector.load %arg7[%c0_12, %c0_13] : memref<1x128xf32, #tpu.memory_space<vmem>>, vector<1x128xf32>
    %cst_14 = arith.constant dense<0.000000e+00> : vector<8x128xf32>
    %21 = tpu.matmul %17, %19, %cst_14 {dimension_numbers = #tpu.dot_dimension_numbers<[1], [0], [0], [1], [0, 0, 1, 1], [], []>} : vector<8x128xbf16>, vector<128x128xbf16>, vector<8x128xf32> -> vector<8x128xf32>
    %22 = vector.broadcast %20 : vector<1x128xf32> to vector<8x128xf32>
    %23 = arith.addf %21, %22 : vector<8x128xf32>
    %24 = math.tanh %23 : vector<8x128xf32>
    %25 = arith.truncf %24 : vector<8x128xf32> to vector<8x128xbf16>
    %c0_15 = arith.constant 0 : index
    %c0_16 = arith.constant 0 : index
    %26 = vector.load %arg8[%c0_15, %c0_16] : memref<128x128xf32, #tpu.memory_space<vmem>>, vector<128x128xf32>
    %27 = arith.truncf %26 : vector<128x128xf32> to vector<128x128xbf16>
    %c0_17 = arith.constant 0 : index
    %c0_18 = arith.constant 0 : index
    %28 = vector.load %arg9[%c0_17, %c0_18] : memref<1x128xf32, #tpu.memory_space<vmem>>, vector<1x128xf32>
    %cst_19 = arith.constant dense<0.000000e+00> : vector<8x128xf32>
    %29 = tpu.matmul %25, %27, %cst_19 {dimension_numbers = #tpu.dot_dimension_numbers<[1], [0], [0], [1], [0, 0, 1, 1], [], []>} : vector<8x128xbf16>, vector<128x128xbf16>, vector<8x128xf32> -> vector<8x128xf32>
    %30 = vector.broadcast %28 : vector<1x128xf32> to vector<8x128xf32>
    %31 = arith.addf %29, %30 : vector<8x128xf32>
    %32 = vector.extract_strided_slice %31 {offsets = [0, 0], sizes = [8, 3], strides = [1, 1]} : vector<8x128xf32> to vector<8x3xf32>
    %c0_20 = arith.constant 0 : index
    %c0_21 = arith.constant 0 : index
    %33 = vector.load %arg18[%c0_20, %c0_21] : memref<8x3xf32, #tpu.memory_space<vmem>>, vector<8x3xf32>
    tpu.vector_store %arg18[%c0_20, %c0_21], %32 {strides = array<i32>} : memref<8x3xf32, #tpu.memory_space<vmem>>, vector<8x3xf32>,
    %34 = arith.truncf %31 : vector<8x128xf32> to vector<8x128xbf16>
    %c0_22 = arith.constant 0 : index
    %c0_23 = arith.constant 0 : index
    %35 = vector.load %arg10[%c0_22, %c0_23] : memref<128x128xf32, #tpu.memory_space<vmem>>, vector<128x128xf32>
    %36 = arith.truncf %35 : vector<128x128xf32> to vector<128x128xbf16>
    %c0_24 = arith.constant 0 : index
    %c0_25 = arith.constant 0 : index
    %37 = vector.load %arg11[%c0_24, %c0_25] : memref<1x128xf32, #tpu.memory_space<vmem>>, vector<1x128xf32>
    %cst_26 = arith.constant dense<0.000000e+00> : vector<8x128xf32>
    %38 = tpu.matmul %34, %36, %cst_26 {dimension_numbers = #tpu.dot_dimension_numbers<[1], [0], [0], [1], [0, 0, 1, 1], [], []>} : vector<8x128xbf16>, vector<128x128xbf16>, vector<8x128xf32> -> vector<8x128xf32>
    %39 = vector.broadcast %37 : vector<1x128xf32> to vector<8x128xf32>
    %40 = arith.addf %38, %39 : vector<8x128xf32>
    %41 = math.tanh %40 : vector<8x128xf32>
    %42 = arith.truncf %41 : vector<8x128xf32> to vector<8x128xbf16>
    %c0_27 = arith.constant 0 : index
    %c0_28 = arith.constant 0 : index
    %43 = vector.load %arg12[%c0_27, %c0_28] : memref<128x128xf32, #tpu.memory_space<vmem>>, vector<128x128xf32>
    %44 = arith.truncf %43 : vector<128x128xf32> to vector<128x128xbf16>
    %c0_29 = arith.constant 0 : index
    %c0_30 = arith.constant 0 : index
    %45 = vector.load %arg13[%c0_29, %c0_30] : memref<1x128xf32, #tpu.memory_space<vmem>>, vector<1x128xf32>
    %cst_31 = arith.constant dense<0.000000e+00> : vector<8x128xf32>
    %46 = tpu.matmul %42, %44, %cst_31 {dimension_numbers = #tpu.dot_dimension_numbers<[1], [0], [0], [1], [0, 0, 1, 1], [], []>} : vector<8x128xbf16>, vector<128x128xbf16>, vector<8x128xf32> -> vector<8x128xf32>
    %47 = vector.broadcast %45 : vector<1x128xf32> to vector<8x128xf32>
    %48 = arith.addf %46, %47 : vector<8x128xf32>
    %49 = math.tanh %48 : vector<8x128xf32>
    %50 = arith.truncf %49 : vector<8x128xf32> to vector<8x128xbf16>
    %c0_32 = arith.constant 0 : index
    %c0_33 = arith.constant 0 : index
    %51 = vector.load %arg14[%c0_32, %c0_33] : memref<128x128xf32, #tpu.memory_space<vmem>>, vector<128x128xf32>
    %52 = arith.truncf %51 : vector<128x128xf32> to vector<128x128xbf16>
    %c0_34 = arith.constant 0 : index
    %c0_35 = arith.constant 0 : index
    %53 = vector.load %arg15[%c0_34, %c0_35] : memref<1x128xf32, #tpu.memory_space<vmem>>, vector<1x128xf32>
    %cst_36 = arith.constant dense<0.000000e+00> : vector<8x128xf32>
    %54 = tpu.matmul %50, %52, %cst_36 {dimension_numbers = #tpu.dot_dimension_numbers<[1], [0], [0], [1], [0, 0, 1, 1], [], []>} : vector<8x128xbf16>, vector<128x128xbf16>, vector<8x128xf32> -> vector<8x128xf32>
    %55 = vector.broadcast %53 : vector<1x128xf32> to vector<8x128xf32>
    %56 = arith.addf %54, %55 : vector<8x128xf32>
    %57 = math.tanh %56 : vector<8x128xf32>
    %58 = arith.truncf %57 : vector<8x128xf32> to vector<8x128xbf16>
    %c0_37 = arith.constant 0 : index
    %c0_38 = arith.constant 0 : index
    %59 = vector.load %arg16[%c0_37, %c0_38] : memref<128x784xf32, #tpu.memory_space<vmem>>, vector<128x784xf32>
    %60 = arith.truncf %59 : vector<128x784xf32> to vector<128x784xbf16>
    %c0_39 = arith.constant 0 : index
    %c0_40 = arith.constant 0 : index
    %61 = vector.load %arg17[%c0_39, %c0_40] : memref<1x784xf32, #tpu.memory_space<vmem>>, vector<1x784xf32>
    %cst_41 = arith.constant dense<0.000000e+00> : vector<8x784xf32>
    %62 = tpu.matmul %58, %60, %cst_41 {dimension_numbers = #tpu.dot_dimension_numbers<[1], [0], [0], [1], [0, 0, 1, 1], [], []>} : vector<8x128xbf16>, vector<128x784xbf16>, vector<8x784xf32> -> vector<8x784xf32>
    %63 = vector.broadcast %61 : vector<1x784xf32> to vector<8x784xf32>
    %64 = arith.addf %62, %63 : vector<8x784xf32>
    %65 = arith.negf %64 : vector<8x784xf32>
    %66 = math.exp %65 : vector<8x784xf32>
    %cst_42 = arith.constant 1.000000e+00 : f32
    %67 = vector.broadcast %cst_42 : f32 to vector<8x784xf32>
    %68 = arith.addf %67, %66 : vector<8x784xf32>
    %69 = arith.divf %67, %68 : vector<8x784xf32>
    %c0_43 = arith.constant 0 : index
    %c0_44 = arith.constant 0 : index
    %70 = vector.load %arg19[%c0_43, %c0_44] : memref<8x784xf32, #tpu.memory_space<vmem>>, vector<8x784xf32>
    tpu.vector_store %arg19[%c0_43, %c0_44], %69 {strides = array<i32>} : memref<8x784xf32, #tpu.memory_space<vmem>>, vector<8x784xf32>,
    return
  }
  func.func @transform_0(%arg0: i32) -> (i32, i32) {
    %c0_i32 = arith.constant 0 : i32
    %c0_i32_0 = arith.constant 0 : i32
    return %arg0, %c0_i32 : i32, i32
  }
  func.func @transform_1(%arg0: i32) -> (i32, i32) {
    %c0_i32 = arith.constant 0 : i32
    %c0_i32_0 = arith.constant 0 : i32
    %c0_i32_1 = arith.constant 0 : i32
    return %c0_i32, %c0_i32_0 : i32, i32
  }
  func.func @transform_2(%arg0: i32) -> (i32, i32) {
    %c0_i32 = arith.constant 0 : i32
    %c0_i32_0 = arith.constant 0 : i32
    %c0_i32_1 = arith.constant 0 : i32
    return %c0_i32, %c0_i32_0 : i32, i32
  }
  func.func @transform_3(%arg0: i32) -> (i32, i32) {
    %c0_i32 = arith.constant 0 : i32
    %c0_i32_0 = arith.constant 0 : i32
    %c0_i32_1 = arith.constant 0 : i32
    return %c0_i32, %c0_i32_0 : i32, i32
  }
  func.func @transform_4(%arg0: i32) -> (i32, i32) {
    %c0_i32 = arith.constant 0 : i32
    %c0_i32_0 = arith.constant 0 : i32
    %c0_i32_1 = arith.constant 0 : i32
    return %c0_i32, %c0_i32_0 : i32, i32
  }
  func.func @transform_5(%arg0: i32) -> (i32, i32) {
    %c0_i32 = arith.constant 0 : i32
    %c0_i32_0 = arith.constant 0 : i32
    %c0_i32_1 = arith.constant 0 : i32
    return %c0_i32, %c0_i32_0 : i32, i32
  }
  func.func @transform_6(%arg0: i32) -> (i32, i32) {
    %c0_i32 = arith.constant 0 : i32
    %c0_i32_0 = arith.constant 0 : i32
    %c0_i32_1 = arith.constant 0 : i32
    return %c0_i32, %c0_i32_0 : i32, i32
  }
  func.func @transform_7(%arg0: i32) -> (i32, i32) {
    %c0_i32 = arith.constant 0 : i32
    %c0_i32_0 = arith.constant 0 : i32
    %c0_i32_1 = arith.constant 0 : i32
    return %c0_i32, %c0_i32_0 : i32, i32
  }
  func.func @transform_8(%arg0: i32) -> (i32, i32) {
    %c0_i32 = arith.constant 0 : i32
    %c0_i32_0 = arith.constant 0 : i32
    %c0_i32_1 = arith.constant 0 : i32
    return %c0_i32, %c0_i32_0 : i32, i32
  }
  func.func @transform_9(%arg0: i32) -> (i32, i32) {
    %c0_i32 = arith.constant 0 : i32
    %c0_i32_0 = arith.constant 0 : i32
    %c0_i32_1 = arith.constant 0 : i32
    return %c0_i32, %c0_i32_0 : i32, i32
  }
  func.func @transform_10(%arg0: i32) -> (i32, i32) {
    %c0_i32 = arith.constant 0 : i32
    %c0_i32_0 = arith.constant 0 : i32
    %c0_i32_1 = arith.constant 0 : i32
    return %c0_i32, %c0_i32_0 : i32, i32
  }
  func.func @transform_11(%arg0: i32) -> (i32, i32) {
    %c0_i32 = arith.constant 0 : i32
    %c0_i32_0 = arith.constant 0 : i32
    %c0_i32_1 = arith.constant 0 : i32
    return %c0_i32, %c0_i32_0 : i32, i32
  }
  func.func @transform_12(%arg0: i32) -> (i32, i32) {
    %c0_i32 = arith.constant 0 : i32
    %c0_i32_0 = arith.constant 0 : i32
    %c0_i32_1 = arith.constant 0 : i32
    return %c0_i32, %c0_i32_0 : i32, i32
  }
  func.func @transform_13(%arg0: i32) -> (i32, i32) {
    %c0_i32 = arith.constant 0 : i32
    %c0_i32_0 = arith.constant 0 : i32
    %c0_i32_1 = arith.constant 0 : i32
    return %c0_i32, %c0_i32_0 : i32, i32
  }
  func.func @transform_14(%arg0: i32) -> (i32, i32) {
    %c0_i32 = arith.constant 0 : i32
    %c0_i32_0 = arith.constant 0 : i32
    %c0_i32_1 = arith.constant 0 : i32
    return %c0_i32, %c0_i32_0 : i32, i32
  }
  func.func @transform_15(%arg0: i32) -> (i32, i32) {
    %c0_i32 = arith.constant 0 : i32
    %c0_i32_0 = arith.constant 0 : i32
    %c0_i32_1 = arith.constant 0 : i32
    return %c0_i32, %c0_i32_0 : i32, i32
  }
  func.func @transform_16(%arg0: i32) -> (i32, i32) {
    %c0_i32 = arith.constant 0 : i32
    %c0_i32_0 = arith.constant 0 : i32
    %c0_i32_1 = arith.constant 0 : i32
    return %c0_i32, %c0_i32_0 : i32, i32
  }
  func.func @transform_17(%arg0: i32) -> (i32, i32) {
    %c0_i32 = arith.constant 0 : i32
    %c0_i32_0 = arith.constant 0 : i32
    return %arg0, %c0_i32 : i32, i32
  }
  func.func @transform_18(%arg0: i32) -> (i32, i32) {
    %c0_i32 = arith.constant 0 : i32
    %c0_i32_0 = arith.constant 0 : i32
    return %arg0, %c0_i32 : i32, i32
  }
}

</mosaic_0001>

<llo_original>
// kernel: tpu_custom_call.1
$region0: #{tpu_custom_call.1}
  #allocation0 [shape = 'u32[]', space=smem, size = 0x4, offset = 0x4, fixed_abs, tag = 'smem constant byte address 0x4 - core index']
  #allocation1 [shape = 'u32[144,128]{1,0:T(1,128)}', space=vmem, size = 0x12000, scoped, tag = 'internal scratch']
  %s0 = inlined_call_operand.vmem [shape: f32[16,784], index: 0, kind: input, shape index: {}]
  %s1 = inlined_call_operand.vmem [shape: f32[784,128], index: 1, kind: input, shape index: {}]
  %s2 = inlined_call_operand.vmem [shape: f32[1,128], index: 2, kind: input, shape index: {}]
  %s3 = inlined_call_operand.vmem [shape: f32[128,128], index: 3, kind: input, shape index: {}]
  %s4 = inlined_call_operand.vmem [shape: f32[1,128], index: 4, kind: input, shape index: {}]
  %s5 = inlined_call_operand.vmem [shape: f32[128,128], index: 5, kind: input, shape index: {}]
  %s6 = inlined_call_operand.vmem [shape: f32[1,128], index: 6, kind: input, shape index: {}]
  %s7 = inlined_call_operand.vmem [shape: f32[128,128], index: 7, kind: input, shape index: {}]
  %s8 = inlined_call_operand.vmem [shape: f32[1,128], index: 8, kind: input, shape index: {}]
  %s9 = inlined_call_operand.vmem [shape: f32[128,128], index: 9, kind: input, shape index: {}]
  %s10 = inlined_call_operand.vmem [shape: f32[1,128], index: 10, kind: input, shape index: {}]
  %s11 = inlined_call_operand.vmem [shape: f32[128,128], index: 11, kind: input, shape index: {}]
  %s12 = inlined_call_operand.vmem [shape: f32[1,128], index: 12, kind: input, shape index: {}]
  %s13 = inlined_call_operand.vmem [shape: f32[128,128], index: 13, kind: input, shape index: {}]
  %s14 = inlined_call_operand.vmem [shape: f32[1,128], index: 14, kind: input, shape index: {}]
  %s15 = inlined_call_operand.vmem [shape: f32[128,784], index: 15, kind: input, shape index: {}]
  %s16 = inlined_call_operand.vmem [shape: f32[1,784], index: 16, kind: input, shape index: {}]
  %s17 = inlined_call_operand.vmem [shape: f32[16,3], index: 17, kind: output, shape index: {0}]
  %s18 = inlined_call_operand.hbm [shape: f32[16,784], index: 18, kind: output, shape index: {1}]
  %19 = xla_tuple %s17, %s18
  %s20 = sld [smem:[#allocation0]]
  $region109: #{tpu_custom_call.1} parent=0
    _
  %s22 = ssub.s32 1, %s20
  %s23 = scalar_select 0, %s22, %s20
  $region1: #{tpu_custom_call.1} parent=0
    #allocation2 [shape = 'u8[57344]{0}', space=vmem, size = 0xe000, scoped, tag = 'output window, operand 1']
    #allocation3 [shape = 's32[2]{0}', space=sflag, size = 0x8, scoped, tag = 'scoped memory for tpu_custom_call.1']
    %24 = vsyncpa [#allocation3], 0
    %s25 = scalar_lea.sflag [#allocation3], 1
    %26 = vsyncpa %s25, 0
    loop: start=0, step=1, limit=4
    $region2: #{tpu_custom_call.1} parent=1 // loop_pre_header
      _
    $region3: #{tpu_custom_call.1} parent=1 // loop_header
      %s28 = sphi 0, %s32
      %p29 = scmp.ge.s32.totalorder %s28, 4
      %s38 = sphi 0, %s40
      %s41 = sphi 0, %s38
      %s42 = sphi 0, %s41
      %s58 = sphi 0, %s42
      %s62 = sphi 0, %s62
      %s64 = sphi 0, %s62
      %s65 = sphi 0, %s64
      %s79 = sphi 0, %s65
      %s83 = sphi 0, %s83
      %s85 = sphi 0, %s83
      %s86 = sphi 0, %s85
      %s100 = sphi 0, %s86
      %s104 = sphi 0, %s104
      %s106 = sphi 0, %s104
      %s107 = sphi 0, %s106
      %s121 = sphi 0, %s107
      %s125 = sphi 0, %s125
      %s127 = sphi 0, %s125
      %s128 = sphi 0, %s127
      %s142 = sphi 0, %s128
      %s146 = sphi 0, %s146
      %s148 = sphi 0, %s146
      %s149 = sphi 0, %s148
      %s163 = sphi 0, %s149
      %s167 = sphi 0, %s167
      %s169 = sphi 0, %s167
      %s170 = sphi 0, %s169
      %s184 = sphi 0, %s170
      %s188 = sphi 0, %s188
      %s190 = sphi 0, %s188
      %s191 = sphi 0, %s190
      %s205 = sphi 0, %s191
      %s209 = sphi 0, %s209
      %s211 = sphi 0, %s209
      %s212 = sphi 0, %s211
      %s226 = sphi 0, %s212
      %s230 = sphi 0, %s230
      %s232 = sphi 0, %s230
      %s233 = sphi 0, %s232
      %s247 = sphi 0, %s233
      %s251 = sphi 0, %s251
      %s253 = sphi 0, %s251
      %s254 = sphi 0, %s253
      %s268 = sphi 0, %s254
      %s272 = sphi 0, %s272
      %s274 = sphi 0, %s272
      %s275 = sphi 0, %s274
      %s289 = sphi 0, %s275
      %s293 = sphi 0, %s293
      %s295 = sphi 0, %s293
      %s296 = sphi 0, %s295
      %s310 = sphi 0, %s296
      %s314 = sphi 0, %s314
      %s316 = sphi 0, %s314
      %s317 = sphi 0, %s316
      %s331 = sphi 0, %s317
      %s335 = sphi 0, %s335
      %s337 = sphi 0, %s335
      %s338 = sphi 0, %s337
      %s352 = sphi 0, %s338
      %s356 = sphi 0, %s356
      %s358 = sphi 0, %s356
      %s359 = sphi 0, %s358
      %s373 = sphi 0, %s359
      %s377 = sphi 0, %s377
      %s379 = sphi 0, %s377
      %s380 = sphi 0, %s379
      %s394 = sphi 0, %s380
      %s400 = sphi 0, %s402
      %s403 = sphi 0, %s400
      %s404 = sphi 0, %s403
      %s420 = sphi 0, %s404
      %s426 = sphi 0, %s428
      %s429 = sphi 0, %s426
      %s430 = sphi 0, %s429
      %s446 = sphi 0, %s430
    $region4: #{tpu_custom_call.1} parent=1 // loop_header_branch
      %31 = sbr.rel (%p29) target = $region8
    $region5: #{tpu_custom_call.1} parent=1 // loop_body
      %s33 = ssub.s32 %s28, 1
      %s34 = ssub.s32 %s28, 2
      %s35 = sadd.s32 %s28, 1
      %s36 = ssub.s32 %s28, %s35
      %p37 = scmp.eq.s32.totalorder %s36, 0
      %s39 = sadd.s32 %s38, 1
      %s40 = scalar_select %p37, %s38, %s39
      %p43 = pneg %p37
      %p44 = scmp.eq.s32.totalorder %s28, 1
      %p45 = por %p43, %p44
      %p46 = scmp.ne.s32.totalorder %s38, %s41
      %p47 = scmp.eq.s32.totalorder %s28, 0
      %p48 = por %p46, %p47
      %p49 = scmp.ne.s32.totalorder %s38, %s41
      %p50 = scmp.eq.s32.totalorder %s33, 1
      %p51 = por %p49, %p50
      %p52 = scmp.ne.s32.totalorder %s41, %s42
      %p53 = scmp.eq.s32.totalorder %s33, 0
      %p54 = por %p52, %p53
      %p55 = scmp.ne.s32.totalorder %s41, %s42
      %p56 = scmp.eq.s32.totalorder %s34, 1
      %p57 = por %p55, %p56
      %p59 = scmp.ne.s32.totalorder %s42, %s58
      %p60 = scmp.eq.s32.totalorder %s34, 0
      %p61 = por %p59, %p60
      %s63 = sadd.s32 %s62, 1
      %p66 = scmp.eq.s32.totalorder %s28, 1
      %p67 = scmp.ne.s32.totalorder %s62, %s64
      %p68 = scmp.eq.s32.totalorder %s28, 0
      %p69 = por %p67, %p68
      %p70 = scmp.ne.s32.totalorder %s62, %s64
      %p71 = scmp.eq.s32.totalorder %s33, 1
      %p72 = por %p70, %p71
      %p73 = scmp.ne.s32.totalorder %s64, %s65
      %p74 = scmp.eq.s32.totalorder %s33, 0
      %p75 = por %p73, %p74
      %p76 = scmp.ne.s32.totalorder %s64, %s65
      %p77 = scmp.eq.s32.totalorder %s34, 1
      %p78 = por %p76, %p77
      %p80 = scmp.ne.s32.totalorder %s65, %s79
      %p81 = scmp.eq.s32.totalorder %s34, 0
      %p82 = por %p80, %p81
      %s84 = sadd.s32 %s83, 1
      %p87 = scmp.eq.s32.totalorder %s28, 1
      %p88 = scmp.ne.s32.totalorder %s83, %s85
      %p89 = scmp.eq.s32.totalorder %s28, 0
      %p90 = por %p88, %p89
      %p91 = scmp.ne.s32.totalorder %s83, %s85
      %p92 = scmp.eq.s32.totalorder %s33, 1
      %p93 = por %p91, %p92
      %p94 = scmp.ne.s32.totalorder %s85, %s86
      %p95 = scmp.eq.s32.totalorder %s33, 0
      %p96 = por %p94, %p95
      %p97 = scmp.ne.s32.totalorder %s85, %s86
      %p98 = scmp.eq.s32.totalorder %s34, 1
      %p99 = por %p97, %p98
      %p101 = scmp.ne.s32.totalorder %s86, %s100
      %p102 = scmp.eq.s32.totalorder %s34, 0
      %p103 = por %p101, %p102
      %s105 = sadd.s32 %s104, 1
      %p108 = scmp.eq.s32.totalorder %s28, 1
      %p109 = scmp.ne.s32.totalorder %s104, %s106
      %p110 = scmp.eq.s32.totalorder %s28, 0
      %p111 = por %p109, %p110
      %p112 = scmp.ne.s32.totalorder %s104, %s106
      %p113 = scmp.eq.s32.totalorder %s33, 1
      %p114 = por %p112, %p113
      %p115 = scmp.ne.s32.totalorder %s106, %s107
      %p116 = scmp.eq.s32.totalorder %s33, 0
      %p117 = por %p115, %p116
      %p118 = scmp.ne.s32.totalorder %s106, %s107
      %p119 = scmp.eq.s32.totalorder %s34, 1
      %p120 = por %p118, %p119
      %p122 = scmp.ne.s32.totalorder %s107, %s121
      %p123 = scmp.eq.s32.totalorder %s34, 0
      %p124 = por %p122, %p123
      %s126 = sadd.s32 %s125, 1
      %p129 = scmp.eq.s32.totalorder %s28, 1
      %p130 = scmp.ne.s32.totalorder %s125, %s127
      %p131 = scmp.eq.s32.totalorder %s28, 0
      %p132 = por %p130, %p131
      %p133 = scmp.ne.s32.totalorder %s125, %s127
      %p134 = scmp.eq.s32.totalorder %s33, 1
      %p135 = por %p133, %p134
      %p136 = scmp.ne.s32.totalorder %s127, %s128
      %p137 = scmp.eq.s32.totalorder %s33, 0
      %p138 = por %p136, %p137
      %p139 = scmp.ne.s32.totalorder %s127, %s128
      %p140 = scmp.eq.s32.totalorder %s34, 1
      %p141 = por %p139, %p140
      %p143 = scmp.ne.s32.totalorder %s128, %s142
      %p144 = scmp.eq.s32.totalorder %s34, 0
      %p145 = por %p143, %p144
      %s147 = sadd.s32 %s146, 1
      %p150 = scmp.eq.s32.totalorder %s28, 1
      %p151 = scmp.ne.s32.totalorder %s146, %s148
      %p152 = scmp.eq.s32.totalorder %s28, 0
      %p153 = por %p151, %p152
      %p154 = scmp.ne.s32.totalorder %s146, %s148
      %p155 = scmp.eq.s32.totalorder %s33, 1
      %p156 = por %p154, %p155
      %p157 = scmp.ne.s32.totalorder %s148, %s149
      %p158 = scmp.eq.s32.totalorder %s33, 0
      %p159 = por %p157, %p158
      %p160 = scmp.ne.s32.totalorder %s148, %s149
      %p161 = scmp.eq.s32.totalorder %s34, 1
      %p162 = por %p160, %p161
      %p164 = scmp.ne.s32.totalorder %s149, %s163
      %p165 = scmp.eq.s32.totalorder %s34, 0
      %p166 = por %p164, %p165
      %s168 = sadd.s32 %s167, 1
      %p171 = scmp.eq.s32.totalorder %s28, 1
      %p172 = scmp.ne.s32.totalorder %s167, %s169
      %p173 = scmp.eq.s32.totalorder %s28, 0
      %p174 = por %p172, %p173
      %p175 = scmp.ne.s32.totalorder %s167, %s169
      %p176 = scmp.eq.s32.totalorder %s33, 1
      %p177 = por %p175, %p176
      %p178 = scmp.ne.s32.totalorder %s169, %s170
      %p179 = scmp.eq.s32.totalorder %s33, 0
      %p180 = por %p178, %p179
      %p181 = scmp.ne.s32.totalorder %s169, %s170
      %p182 = scmp.eq.s32.totalorder %s34, 1
      %p183 = por %p181, %p182
      %p185 = scmp.ne.s32.totalorder %s170, %s184
      %p186 = scmp.eq.s32.totalorder %s34, 0
      %p187 = por %p185, %p186
      %s189 = sadd.s32 %s188, 1
      %p192 = scmp.eq.s32.totalorder %s28, 1
      %p193 = scmp.ne.s32.totalorder %s188, %s190
      %p194 = scmp.eq.s32.totalorder %s28, 0
      %p195 = por %p193, %p194
      %p196 = scmp.ne.s32.totalorder %s188, %s190
      %p197 = scmp.eq.s32.totalorder %s33, 1
      %p198 = por %p196, %p197
      %p199 = scmp.ne.s32.totalorder %s190, %s191
      %p200 = scmp.eq.s32.totalorder %s33, 0
      %p201 = por %p199, %p200
      %p202 = scmp.ne.s32.totalorder %s190, %s191
      %p203 = scmp.eq.s32.totalorder %s34, 1
      %p204 = por %p202, %p203
      %p206 = scmp.ne.s32.totalorder %s191, %s205
      %p207 = scmp.eq.s32.totalorder %s34, 0
      %p208 = por %p206, %p207
      %s210 = sadd.s32 %s209, 1
      %p213 = scmp.eq.s32.totalorder %s28, 1
      %p214 = scmp.ne.s32.totalorder %s209, %s211
      %p215 = scmp.eq.s32.totalorder %s28, 0
      %p216 = por %p214, %p215
      %p217 = scmp.ne.s32.totalorder %s209, %s211
      %p218 = scmp.eq.s32.totalorder %s33, 1
      %p219 = por %p217, %p218
      %p220 = scmp.ne.s32.totalorder %s211, %s212
      %p221 = scmp.eq.s32.totalorder %s33, 0
      %p222 = por %p220, %p221
      %p223 = scmp.ne.s32.totalorder %s211, %s212
      %p224 = scmp.eq.s32.totalorder %s34, 1
      %p225 = por %p223, %p224
      %p227 = scmp.ne.s32.totalorder %s212, %s226
      %p228 = scmp.eq.s32.totalorder %s34, 0
      %p229 = por %p227, %p228
      %s231 = sadd.s32 %s230, 1
      %p234 = scmp.eq.s32.totalorder %s28, 1
      %p235 = scmp.ne.s32.totalorder %s230, %s232
      %p236 = scmp.eq.s32.totalorder %s28, 0
      %p237 = por %p235, %p236
      %p238 = scmp.ne.s32.totalorder %s230, %s232
      %p239 = scmp.eq.s32.totalorder %s33, 1
      %p240 = por %p238, %p239
      %p241 = scmp.ne.s32.totalorder %s232, %s233
      %p242 = scmp.eq.s32.totalorder %s33, 0
      %p243 = por %p241, %p242
      %p244 = scmp.ne.s32.totalorder %s232, %s233
      %p245 = scmp.eq.s32.totalorder %s34, 1
      %p246 = por %p244, %p245
      %p248 = scmp.ne.s32.totalorder %s233, %s247
      %p249 = scmp.eq.s32.totalorder %s34, 0
      %p250 = por %p248, %p249
      %s252 = sadd.s32 %s251, 1
      %p255 = scmp.eq.s32.totalorder %s28, 1
      %p256 = scmp.ne.s32.totalorder %s251, %s253
      %p257 = scmp.eq.s32.totalorder %s28, 0
      %p258 = por %p256, %p257
      %p259 = scmp.ne.s32.totalorder %s251, %s253
      %p260 = scmp.eq.s32.totalorder %s33, 1
      %p261 = por %p259, %p260
      %p262 = scmp.ne.s32.totalorder %s253, %s254
      %p263 = scmp.eq.s32.totalorder %s33, 0
      %p264 = por %p262, %p263
      %p265 = scmp.ne.s32.totalorder %s253, %s254
      %p266 = scmp.eq.s32.totalorder %s34, 1
      %p267 = por %p265, %p266
      %p269 = scmp.ne.s32.totalorder %s254, %s268
      %p270 = scmp.eq.s32.totalorder %s34, 0
      %p271 = por %p269, %p270
      %s273 = sadd.s32 %s272, 1
      %p276 = scmp.eq.s32.totalorder %s28, 1
      %p277 = scmp.ne.s32.totalorder %s272, %s274
      %p278 = scmp.eq.s32.totalorder %s28, 0
      %p279 = por %p277, %p278
      %p280 = scmp.ne.s32.totalorder %s272, %s274
      %p281 = scmp.eq.s32.totalorder %s33, 1
      %p282 = por %p280, %p281
      %p283 = scmp.ne.s32.totalorder %s274, %s275
      %p284 = scmp.eq.s32.totalorder %s33, 0
      %p285 = por %p283, %p284
      %p286 = scmp.ne.s32.totalorder %s274, %s275
      %p287 = scmp.eq.s32.totalorder %s34, 1
      %p288 = por %p286, %p287
      %p290 = scmp.ne.s32.totalorder %s275, %s289
      %p291 = scmp.eq.s32.totalorder %s34, 0
      %p292 = por %p290, %p291
      %s294 = sadd.s32 %s293, 1
      %p297 = scmp.eq.s32.totalorder %s28, 1
      %p298 = scmp.ne.s32.totalorder %s293, %s295
      %p299 = scmp.eq.s32.totalorder %s28, 0
      %p300 = por %p298, %p299
      %p301 = scmp.ne.s32.totalorder %s293, %s295
      %p302 = scmp.eq.s32.totalorder %s33, 1
      %p303 = por %p301, %p302
      %p304 = scmp.ne.s32.totalorder %s295, %s296
      %p305 = scmp.eq.s32.totalorder %s33, 0
      %p306 = por %p304, %p305
      %p307 = scmp.ne.s32.totalorder %s295, %s296
      %p308 = scmp.eq.s32.totalorder %s34, 1
      %p309 = por %p307, %p308
      %p311 = scmp.ne.s32.totalorder %s296, %s310
      %p312 = scmp.eq.s32.totalorder %s34, 0
      %p313 = por %p311, %p312
      %s315 = sadd.s32 %s314, 1
      %p318 = scmp.eq.s32.totalorder %s28, 1
      %p319 = scmp.ne.s32.totalorder %s314, %s316
      %p320 = scmp.eq.s32.totalorder %s28, 0
      %p321 = por %p319, %p320
      %p322 = scmp.ne.s32.totalorder %s314, %s316
      %p323 = scmp.eq.s32.totalorder %s33, 1
      %p324 = por %p322, %p323
      %p325 = scmp.ne.s32.totalorder %s316, %s317
      %p326 = scmp.eq.s32.totalorder %s33, 0
      %p327 = por %p325, %p326
      %p328 = scmp.ne.s32.totalorder %s316, %s317
      %p329 = scmp.eq.s32.totalorder %s34, 1
      %p330 = por %p328, %p329
      %p332 = scmp.ne.s32.totalorder %s317, %s331
      %p333 = scmp.eq.s32.totalorder %s34, 0
      %p334 = por %p332, %p333
      %s336 = sadd.s32 %s335, 1
      %p339 = scmp.eq.s32.totalorder %s28, 1
      %p340 = scmp.ne.s32.totalorder %s335, %s337
      %p341 = scmp.eq.s32.totalorder %s28, 0
      %p342 = por %p340, %p341
      %p343 = scmp.ne.s32.totalorder %s335, %s337
      %p344 = scmp.eq.s32.totalorder %s33, 1
      %p345 = por %p343, %p344
      %p346 = scmp.ne.s32.totalorder %s337, %s338
      %p347 = scmp.eq.s32.totalorder %s33, 0
      %p348 = por %p346, %p347
      %p349 = scmp.ne.s32.totalorder %s337, %s338
      %p350 = scmp.eq.s32.totalorder %s34, 1
      %p351 = por %p349, %p350
      %p353 = scmp.ne.s32.totalorder %s338, %s352
      %p354 = scmp.eq.s32.totalorder %s34, 0
      %p355 = por %p353, %p354
      %s357 = sadd.s32 %s356, 1
      %p360 = scmp.eq.s32.totalorder %s28, 1
      %p361 = scmp.ne.s32.totalorder %s356, %s358
      %p362 = scmp.eq.s32.totalorder %s28, 0
      %p363 = por %p361, %p362
      %p364 = scmp.ne.s32.totalorder %s356, %s358
      %p365 = scmp.eq.s32.totalorder %s33, 1
      %p366 = por %p364, %p365
      %p367 = scmp.ne.s32.totalorder %s358, %s359
      %p368 = scmp.eq.s32.totalorder %s33, 0
      %p369 = por %p367, %p368
      %p370 = scmp.ne.s32.totalorder %s358, %s359
      %p371 = scmp.eq.s32.totalorder %s34, 1
      %p372 = por %p370, %p371
      %p374 = scmp.ne.s32.totalorder %s359, %s373
      %p375 = scmp.eq.s32.totalorder %s34, 0
      %p376 = por %p374, %p375
      %s378 = sadd.s32 %s377, 1
      %p381 = scmp.eq.s32.totalorder %s28, 1
      %p382 = scmp.ne.s32.totalorder %s377, %s379
      %p383 = scmp.eq.s32.totalorder %s28, 0
      %p384 = por %p382, %p383
      %p385 = scmp.ne.s32.totalorder %s377, %s379
      %p386 = scmp.eq.s32.totalorder %s33, 1
      %p387 = por %p385, %p386
      %p388 = scmp.ne.s32.totalorder %s379, %s380
      %p389 = scmp.eq.s32.totalorder %s33, 0
      %p390 = por %p388, %p389
      %p391 = scmp.ne.s32.totalorder %s379, %s380
      %p392 = scmp.eq.s32.totalorder %s34, 1
      %p393 = por %p391, %p392
      %p395 = scmp.ne.s32.totalorder %s380, %s394
      %p396 = scmp.eq.s32.totalorder %s34, 0
      %p397 = por %p395, %p396
      %s398 = ssub.s32 %s28, %s35
      %p399 = scmp.eq.s32.totalorder %s398, 0
      %s401 = sadd.s32 %s400, 1
      %s402 = scalar_select %p399, %s400, %s401
      %p405 = pneg %p399
      %p406 = scmp.eq.s32.totalorder %s28, 1
      %p407 = por %p405, %p406
      %p408 = scmp.ne.s32.totalorder %s400, %s403
      %p409 = scmp.eq.s32.totalorder %s28, 0
      %p410 = por %p408, %p409
      %p411 = scmp.ne.s32.totalorder %s400, %s403
      %p412 = scmp.eq.s32.totalorder %s33, 1
      %p413 = por %p411, %p412
      %p414 = scmp.ne.s32.totalorder %s403, %s404
      %p415 = scmp.eq.s32.totalorder %s33, 0
      %p416 = por %p414, %p415
      %p417 = scmp.ne.s32.totalorder %s403, %s404
      %p418 = scmp.eq.s32.totalorder %s34, 1
      %p419 = por %p417, %p418
      %p421 = scmp.ne.s32.totalorder %s404, %s420
      %p422 = scmp.eq.s32.totalorder %s34, 0
      %p423 = por %p421, %p422
      %s424 = ssub.s32 %s28, %s35
      %p425 = scmp.eq.s32.totalorder %s424, 0
      %s427 = sadd.s32 %s426, 1
      %s428 = scalar_select %p425, %s426, %s427
      %p431 = pneg %p425
      %p432 = scmp.eq.s32.totalorder %s28, 1
      %p433 = por %p431, %p432
      %p434 = scmp.ne.s32.totalorder %s426, %s429
      %p435 = scmp.eq.s32.totalorder %s28, 0
      %p436 = por %p434, %p435
      %p437 = scmp.ne.s32.totalorder %s426, %s429
      %p438 = scmp.eq.s32.totalorder %s33, 1
      %p439 = por %p437, %p438
      %p440 = scmp.ne.s32.totalorder %s429, %s430
      %p441 = scmp.eq.s32.totalorder %s33, 0
      %p442 = por %p440, %p441
      %p443 = scmp.ne.s32.totalorder %s429, %s430
      %p444 = scmp.eq.s32.totalorder %s34, 1
      %p445 = por %p443, %p444
      %p447 = scmp.ne.s32.totalorder %s430, %s446
      %p448 = scmp.eq.s32.totalorder %s34, 0
      %p449 = por %p447, %p448
      %p450 = scmp.le.s32.totalorder 1, %s28
      %p451 = scmp.lt.s32.totalorder %s28, 3
      %p452 = pnand %p450, %p451
      %p453 = pneg %p452
      // Predicated region
      $region9: #{tpu_custom_call.1} parent=5 // pred_check
        _
      $region10: #{tpu_custom_call.1} parent=5 // pred_check_branch
        %455 = sbr.rel (%p452) target = $region12
      $region11: #{tpu_custom_call.1} parent=5 // pred_region
        %s456 = ssub.s32 %s28, 1
        // Predicated region
        $region13: #{tpu_custom_call.1} parent=11 // pred_check
          %p457 = pneg %p75
        $region14: #{tpu_custom_call.1} parent=11 // pred_check_branch
          %459 = sbr.rel (%p457) target = $region16
        $region15: #{tpu_custom_call.1} parent=11 // pred_region
          _
        $region16: #{tpu_custom_call.1} parent=11 // pred_fallthru
          _
        // Predicated region
        $region17: #{tpu_custom_call.1} parent=11 // pred_check
          %p460 = pneg %p96
        $region18: #{tpu_custom_call.1} parent=11 // pred_check_branch
          %462 = sbr.rel (%p460) target = $region20
        $region19: #{tpu_custom_call.1} parent=11 // pred_region
          _
        $region20: #{tpu_custom_call.1} parent=11 // pred_fallthru
          _
        // Predicated region
        $region21: #{tpu_custom_call.1} parent=11 // pred_check
          %p463 = pneg %p117
        $region22: #{tpu_custom_call.1} parent=11 // pred_check_branch
          %465 = sbr.rel (%p463) target = $region24
        $region23: #{tpu_custom_call.1} parent=11 // pred_region
          _
        $region24: #{tpu_custom_call.1} parent=11 // pred_fallthru
          _
        // Predicated region
        $region25: #{tpu_custom_call.1} parent=11 // pred_check
          %p466 = pneg %p138
        $region26: #{tpu_custom_call.1} parent=11 // pred_check_branch
          %468 = sbr.rel (%p466) target = $region28
        $region27: #{tpu_custom_call.1} parent=11 // pred_region
          _
        $region28: #{tpu_custom_call.1} parent=11 // pred_fallthru
          _
        // Predicated region
        $region29: #{tpu_custom_call.1} parent=11 // pred_check
          %p469 = pneg %p159
        $region30: #{tpu_custom_call.1} parent=11 // pred_check_branch
          %471 = sbr.rel (%p469) target = $region32
        $region31: #{tpu_custom_call.1} parent=11 // pred_region
          _
        $region32: #{tpu_custom_call.1} parent=11 // pred_fallthru
          _
        // Predicated region
        $region33: #{tpu_custom_call.1} parent=11 // pred_check
          %p472 = pneg %p180
        $region34: #{tpu_custom_call.1} parent=11 // pred_check_branch
          %474 = sbr.rel (%p472) target = $region36
        $region35: #{tpu_custom_call.1} parent=11 // pred_region
          _
        $region36: #{tpu_custom_call.1} parent=11 // pred_fallthru
          _
        // Predicated region
        $region37: #{tpu_custom_call.1} parent=11 // pred_check
          %p475 = pneg %p201
        $region38: #{tpu_custom_call.1} parent=11 // pred_check_branch
          %477 = sbr.rel (%p475) target = $region40
        $region39: #{tpu_custom_call.1} parent=11 // pred_region
          _
        $region40: #{tpu_custom_call.1} parent=11 // pred_fallthru
          _
        // Predicated region
        $region41: #{tpu_custom_call.1} parent=11 // pred_check
          %p478 = pneg %p222
        $region42: #{tpu_custom_call.1} parent=11 // pred_check_branch
          %480 = sbr.rel (%p478) target = $region44
        $region43: #{tpu_custom_call.1} parent=11 // pred_region
          _
        $region44: #{tpu_custom_call.1} parent=11 // pred_fallthru
          _
        // Predicated region
        $region45: #{tpu_custom_call.1} parent=11 // pred_check
          %p481 = pneg %p243
        $region46: #{tpu_custom_call.1} parent=11 // pred_check_branch
          %483 = sbr.rel (%p481) target = $region48
        $region47: #{tpu_custom_call.1} parent=11 // pred_region
          _
        $region48: #{tpu_custom_call.1} parent=11 // pred_fallthru
          _
        // Predicated region
        $region49: #{tpu_custom_call.1} parent=11 // pred_check
          %p484 = pneg %p264
        $region50: #{tpu_custom_call.1} parent=11 // pred_check_branch
          %486 = sbr.rel (%p484) target = $region52
        $region51: #{tpu_custom_call.1} parent=11 // pred_region
          _
        $region52: #{tpu_custom_call.1} parent=11 // pred_fallthru
          _
        // Predicated region
        $region53: #{tpu_custom_call.1} parent=11 // pred_check
          %p487 = pneg %p285
        $region54: #{tpu_custom_call.1} parent=11 // pred_check_branch
          %489 = sbr.rel (%p487) target = $region56
        $region55: #{tpu_custom_call.1} parent=11 // pred_region
          _
        $region56: #{tpu_custom_call.1} parent=11 // pred_fallthru
          _
        // Predicated region
        $region57: #{tpu_custom_call.1} parent=11 // pred_check
          %p490 = pneg %p306
        $region58: #{tpu_custom_call.1} parent=11 // pred_check_branch
          %492 = sbr.rel (%p490) target = $region60
        $region59: #{tpu_custom_call.1} parent=11 // pred_region
          _
        $region60: #{tpu_custom_call.1} parent=11 // pred_fallthru
          _
        // Predicated region
        $region61: #{tpu_custom_call.1} parent=11 // pred_check
          %p493 = pneg %p327
        $region62: #{tpu_custom_call.1} parent=11 // pred_check_branch
          %495 = sbr.rel (%p493) target = $region64
        $region63: #{tpu_custom_call.1} parent=11 // pred_region
          _
        $region64: #{tpu_custom_call.1} parent=11 // pred_fallthru
          _
        // Predicated region
        $region65: #{tpu_custom_call.1} parent=11 // pred_check
          %p496 = pneg %p348
        $region66: #{tpu_custom_call.1} parent=11 // pred_check_branch
          %498 = sbr.rel (%p496) target = $region68
        $region67: #{tpu_custom_call.1} parent=11 // pred_region
          _
        $region68: #{tpu_custom_call.1} parent=11 // pred_fallthru
          _
        // Predicated region
        $region69: #{tpu_custom_call.1} parent=11 // pred_check
          %p499 = pneg %p369
        $region70: #{tpu_custom_call.1} parent=11 // pred_check_branch
          %501 = sbr.rel (%p499) target = $region72
        $region71: #{tpu_custom_call.1} parent=11 // pred_region
          _
        $region72: #{tpu_custom_call.1} parent=11 // pred_fallthru
          _
        // Predicated region
        $region73: #{tpu_custom_call.1} parent=11 // pred_check
          %p502 = pneg %p390
        $region74: #{tpu_custom_call.1} parent=11 // pred_check_branch
          %504 = sbr.rel (%p502) target = $region76
        $region75: #{tpu_custom_call.1} parent=11 // pred_region
          _
        $region76: #{tpu_custom_call.1} parent=11 // pred_fallthru
          _
      $region12: #{tpu_custom_call.1} parent=5 // pred_fallthru
        _
      %p505 = scmp.lt.s32.totalorder %s28, 2
      // Predicated region
      $region77: #{tpu_custom_call.1} parent=5 // pred_check
        %p506 = pneg %p505
      $region78: #{tpu_custom_call.1} parent=5 // pred_check_branch
        %508 = sbr.rel (%p506) target = $region80
      $region79: #{tpu_custom_call.1} parent=5 // pred_region
        // Predicated region
        $region81: #{tpu_custom_call.1} parent=79 // pred_check
          %p509 = pneg %p48
        $region82: #{tpu_custom_call.1} parent=79 // pred_check_branch
          %511 = sbr.rel (%p509) target = $region84
        $region83: #{tpu_custom_call.1} parent=79 // pred_region
          %p512 = scmp.lt.s32.totalorder %s28, 1
          %s513 = scalar_select %p512, %s28, 1
          %s514 = smul.addr %s513, 7
          %s515 = smul.addr %s514, 8
          %s516 = scalar_lea.vmem %s0, %s515
        $region84: #{tpu_custom_call.1} parent=79 // pred_fallthru
          _
      $region80: #{tpu_custom_call.1} parent=5 // pred_fallthru
        _
      %p517 = scmp.le.s32.totalorder 1, %s28
      %p518 = scmp.lt.s32.totalorder %s28, 3
      %p519 = pnand %p517, %p518
      %p520 = pneg %p519
      // Predicated region
      $region85: #{tpu_custom_call.1} parent=5 // pred_check
        _
      $region86: #{tpu_custom_call.1} parent=5 // pred_check_branch
        %522 = sbr.rel (%p519) target = $region88
      $region87: #{tpu_custom_call.1} parent=5 // pred_region
        %s523 = ssub.s32 %s28, 1
        %p524 = scmp.lt.s32.totalorder %s33, 1
        %s525 = scalar_select %p524, %s33, 1
        %s526 = smul.addr %s525, 7
        %s527 = smul.addr %s526, 8
        %s528 = scalar_lea.vmem %s0, %s527
        %p529 = pneg %p54
        %p530 = pneg %p51
        %p531 = pneg %p75
        %p532 = pneg %p72
        %p533 = pneg %p96
        %p534 = pneg %p93
        %p535 = pneg %p117
        %p536 = pneg %p114
        %p537 = pneg %p138
        %p538 = pneg %p135
        %p539 = pneg %p159
        %p540 = pneg %p156
        %p541 = pneg %p180
        %p542 = pneg %p177
        %p543 = pneg %p201
        %p544 = pneg %p198
        %p545 = pneg %p222
        %p546 = pneg %p219
        %p547 = pneg %p243
        %p548 = pneg %p240
        %p549 = pneg %p264
        %p550 = pneg %p261
        %p551 = pneg %p285
        %p552 = pneg %p282
        %p553 = pneg %p306
        %p554 = pneg %p303
        %p555 = pneg %p327
        %p556 = pneg %p324
        %p557 = pneg %p348
        %p558 = pneg %p345
        %p559 = pneg %p369
        %p560 = pneg %p366
        %p561 = pneg %p390
        %p562 = pneg %p387
        %p563 = pneg %p416
        %p564 = pneg %p413
        %p565 = scmp.lt.s32.totalorder %s33, 1
        %s566 = scalar_select %p565, %s33, 1
        %s567 = smul.addr %s566, 8
        %s568 = scalar_lea.vmem %s17, %s567
        %p569 = pneg %p442
        %p570 = pneg %p439
        %s571 = sand.u32 %s429, 1
        %s572 = scalar_lea.sflag [#allocation3], %s571
        %s573 = sand.u32 %s429, 1
        %s574 = smul.addr %s573, 56
        %s575 = scalar_lea.vmem [#allocation2], %s574
        %p576 = scmp.lt.s32.totalorder %s33, 1
        %s577 = scalar_select %p576, %s33, 1
        %s578 = smul.addr %s577, 7
        %s579 = smul.addr %s578, 8
        %s580 = scalar_lea.vmem %s0, %s579
        %p581 = scmp.lt.s32.totalorder %s33, 1
        %s582 = scalar_select %p581, %s33, 1
        %s583 = smul.addr %s582, 8
        %s584 = scalar_lea.vmem %s17, %s583
        %v586 = vld [vmem:[%s580] sm:$0xff]
        %v587 = vld [vmem:[%s580 + $0x8] sm:$0xff]
        %v588 = vld [vmem:[%s580 + $0x10] sm:$0xff]
        %v589 = vld [vmem:[%s580 + $0x18] sm:$0xff]
        %v590 = vld [vmem:[%s580 + $0x20] sm:$0xff]
        %v591 = vld [vmem:[%s580 + $0x28] sm:$0xff]
        %v592 = vld [vmem:[%s580 + $0x30] sm:$0xff]
        %v593 = vpack.c.bf16 %v586, %v586
        %v594 = vpack.c.bf16 %v587, %v587
        %v595 = vpack.c.bf16 %v588, %v588
        %v596 = vpack.c.bf16 %v589, %v589
        %v597 = vpack.c.bf16 %v590, %v590
        %v598 = vpack.c.bf16 %v591, %v591
        %v599 = vpack.c.bf16 %v592, %v592
        %v600 = vld [vmem:[%s1] sm:$0xff]
        %v601 = vld [vmem:[%s1 + $0x8] sm:$0xff]
        %v602 = vld [vmem:[%s1 + $0x10] sm:$0xff]
        %v603 = vld [vmem:[%s1 + $0x18] sm:$0xff]
        %v604 = vld [vmem:[%s1 + $0x20] sm:$0xff]
        %v605 = vld [vmem:[%s1 + $0x28] sm:$0xff]
        %v606 = vld [vmem:[%s1 + $0x30] sm:$0xff]
        %v607 = vld [vmem:[%s1 + $0x38] sm:$0xff]
        %v608 = vld [vmem:[%s1 + $0x40] sm:$0xff]
        %v609 = vld [vmem:[%s1 + $0x48] sm:$0xff]
        %v610 = vld [vmem:[%s1 + $0x50] sm:$0xff]
        %v611 = vld [vmem:[%s1 + $0x58] sm:$0xff]
        %v612 = vld [vmem:[%s1 + $0x60] sm:$0xff]
        %v613 = vld [vmem:[%s1 + $0x68] sm:$0xff]
        %v614 = vld [vmem:[%s1 + $0x70] sm:$0xff]
        %v615 = vld [vmem:[%s1 + $0x78] sm:$0xff]
        %v616 = vld [vmem:[%s1 + $0x80] sm:$0xff]
        %v617 = vld [vmem:[%s1 + $0x88] sm:$0xff]
        %v618 = vld [vmem:[%s1 + $0x90] sm:$0xff]
        %v619 = vld [vmem:[%s1 + $0x98] sm:$0xff]
        %v620 = vld [vmem:[%s1 + $0xa0] sm:$0xff]
        %v621 = vld [vmem:[%s1 + $0xa8] sm:$0xff]
        %v622 = vld [vmem:[%s1 + $0xb0] sm:$0xff]
        %v623 = vld [vmem:[%s1 + $0xb8] sm:$0xff]
        %v624 = vld [vmem:[%s1 + $0xc0] sm:$0xff]
        %v625 = vld [vmem:[%s1 + $0xc8] sm:$0xff]
        %v626 = vld [vmem:[%s1 + $0xd0] sm:$0xff]
        %v627 = vld [vmem:[%s1 + $0xd8] sm:$0xff]
        %v628 = vld [vmem:[%s1 + $0xe0] sm:$0xff]
        %v629 = vld [vmem:[%s1 + $0xe8] sm:$0xff]
        %v630 = vld [vmem:[%s1 + $0xf0] sm:$0xff]
        %v631 = vld [vmem:[%s1 + $0xf8] sm:$0xff]
        %v632 = vld [vmem:[%s1 + $0x100] sm:$0xff]
        %v633 = vld [vmem:[%s1 + $0x108] sm:$0xff]
        %v634 = vld [vmem:[%s1 + $0x110] sm:$0xff]
        %v635 = vld [vmem:[%s1 + $0x118] sm:$0xff]
        %v636 = vld [vmem:[%s1 + $0x120] sm:$0xff]
        %v637 = vld [vmem:[%s1 + $0x128] sm:$0xff]
        %v638 = vld [vmem:[%s1 + $0x130] sm:$0xff]
        %v639 = vld [vmem:[%s1 + $0x138] sm:$0xff]
        %v640 = vld [vmem:[%s1 + $0x140] sm:$0xff]
        %v641 = vld [vmem:[%s1 + $0x148] sm:$0xff]
        %v642 = vld [vmem:[%s1 + $0x150] sm:$0xff]
        %v643 = vld [vmem:[%s1 + $0x158] sm:$0xff]
        %v644 = vld [vmem:[%s1 + $0x160] sm:$0xff]
        %v645 = vld [vmem:[%s1 + $0x168] sm:$0xff]
        %v646 = vld [vmem:[%s1 + $0x170] sm:$0xff]
        %v647 = vld [vmem:[%s1 + $0x178] sm:$0xff]
        %v648 = vld [vmem:[%s1 + $0x180] sm:$0xff]
        %v649 = vld [vmem:[%s1 + $0x188] sm:$0xff]
        %v650 = vld [vmem:[%s1 + $0x190] sm:$0xff]
        %v651 = vld [vmem:[%s1 + $0x198] sm:$0xff]
        %v652 = vld [vmem:[%s1 + $0x1a0] sm:$0xff]
        %v653 = vld [vmem:[%s1 + $0x1a8] sm:$0xff]
        %v654 = vld [vmem:[%s1 + $0x1b0] sm:$0xff]
        %v655 = vld [vmem:[%s1 + $0x1b8] sm:$0xff]
        %v656 = vld [vmem:[%s1 + $0x1c0] sm:$0xff]
        %v657 = vld [vmem:[%s1 + $0x1c8] sm:$0xff]
        %v658 = vld [vmem:[%s1 + $0x1d0] sm:$0xff]
        %v659 = vld [vmem:[%s1 + $0x1d8] sm:$0xff]
        %v660 = vld [vmem:[%s1 + $0x1e0] sm:$0xff]
        %v661 = vld [vmem:[%s1 + $0x1e8] sm:$0xff]
        %v662 = vld [vmem:[%s1 + $0x1f0] sm:$0xff]
        %v663 = vld [vmem:[%s1 + $0x1f8] sm:$0xff]
        %v664 = vld [vmem:[%s1 + $0x200] sm:$0xff]
        %v665 = vld [vmem:[%s1 + $0x208] sm:$0xff]
        %v666 = vld [vmem:[%s1 + $0x210] sm:$0xff]
        %v667 = vld [vmem:[%s1 + $0x218] sm:$0xff]
        %v668 = vld [vmem:[%s1 + $0x220] sm:$0xff]
        %v669 = vld [vmem:[%s1 + $0x228] sm:$0xff]
        %v670 = vld [vmem:[%s1 + $0x230] sm:$0xff]
        %v671 = vld [vmem:[%s1 + $0x238] sm:$0xff]
        %v672 = vld [vmem:[%s1 + $0x240] sm:$0xff]
        %v673 = vld [vmem:[%s1 + $0x248] sm:$0xff]
        %v674 = vld [vmem:[%s1 + $0x250] sm:$0xff]
        %v675 = vld [vmem:[%s1 + $0x258] sm:$0xff]
        %v676 = vld [vmem:[%s1 + $0x260] sm:$0xff]
        %v677 = vld [vmem:[%s1 + $0x268] sm:$0xff]
        %v678 = vld [vmem:[%s1 + $0x270] sm:$0xff]
        %v679 = vld [vmem:[%s1 + $0x278] sm:$0xff]
        %v680 = vld [vmem:[%s1 + $0x280] sm:$0xff]
        %v681 = vld [vmem:[%s1 + $0x288] sm:$0xff]
        %v682 = vld [vmem:[%s1 + $0x290] sm:$0xff]
        %v683 = vld [vmem:[%s1 + $0x298] sm:$0xff]
        %v684 = vld [vmem:[%s1 + $0x2a0] sm:$0xff]
        %v685 = vld [vmem:[%s1 + $0x2a8] sm:$0xff]
        %v686 = vld [vmem:[%s1 + $0x2b0] sm:$0xff]
        %v687 = vld [vmem:[%s1 + $0x2b8] sm:$0xff]
        %v688 = vld [vmem:[%s1 + $0x2c0] sm:$0xff]
        %v689 = vld [vmem:[%s1 + $0x2c8] sm:$0xff]
        %v690 = vld [vmem:[%s1 + $0x2d0] sm:$0xff]
        %v691 = vld [vmem:[%s1 + $0x2d8] sm:$0xff]
        %v692 = vld [vmem:[%s1 + $0x2e0] sm:$0xff]
        %v693 = vld [vmem:[%s1 + $0x2e8] sm:$0xff]
        %v694 = vld [vmem:[%s1 + $0x2f0] sm:$0xff]
        %v695 = vld [vmem:[%s1 + $0x2f8] sm:$0xff]
        %v696 = vld [vmem:[%s1 + $0x300] sm:$0xff]
        %v697 = vld [vmem:[%s1 + $0x308] sm:$0xff]
        %v698 = vpack.c.bf16 %v601, %v600
        %v699 = vpack.c.bf16 %v603, %v602
        %v700 = vpack.c.bf16 %v605, %v604
        %v701 = vpack.c.bf16 %v607, %v606
        %v702 = vpack.c.bf16 %v609, %v608
        %v703 = vpack.c.bf16 %v611, %v610
        %v704 = vpack.c.bf16 %v613, %v612
        %v705 = vpack.c.bf16 %v615, %v614
        %v706 = vpack.c.bf16 %v617, %v616
        %v707 = vpack.c.bf16 %v619, %v618
        %v708 = vpack.c.bf16 %v621, %v620
        %v709 = vpack.c.bf16 %v623, %v622
        %v710 = vpack.c.bf16 %v625, %v624
        %v711 = vpack.c.bf16 %v627, %v626
        %v712 = vpack.c.bf16 %v629, %v628
        %v713 = vpack.c.bf16 %v631, %v630
        %v714 = vpack.c.bf16 %v633, %v632
        %v715 = vpack.c.bf16 %v635, %v634
        %v716 = vpack.c.bf16 %v637, %v636
        %v717 = vpack.c.bf16 %v639, %v638
        %v718 = vpack.c.bf16 %v641, %v640
        %v719 = vpack.c.bf16 %v643, %v642
        %v720 = vpack.c.bf16 %v645, %v644
        %v721 = vpack.c.bf16 %v647, %v646
        %v722 = vpack.c.bf16 %v649, %v648
        %v723 = vpack.c.bf16 %v651, %v650
        %v724 = vpack.c.bf16 %v653, %v652
        %v725 = vpack.c.bf16 %v655, %v654
        %v726 = vpack.c.bf16 %v657, %v656
        %v727 = vpack.c.bf16 %v659, %v658
        %v728 = vpack.c.bf16 %v661, %v660
        %v729 = vpack.c.bf16 %v663, %v662
        %v730 = vpack.c.bf16 %v665, %v664
        %v731 = vpack.c.bf16 %v667, %v666
        %v732 = vpack.c.bf16 %v669, %v668
        %v733 = vpack.c.bf16 %v671, %v670
        %v734 = vpack.c.bf16 %v673, %v672
        %v735 = vpack.c.bf16 %v675, %v674
        %v736 = vpack.c.bf16 %v677, %v676
        %v737 = vpack.c.bf16 %v679, %v678
        %v738 = vpack.c.bf16 %v681, %v680
        %v739 = vpack.c.bf16 %v683, %v682
        %v740 = vpack.c.bf16 %v685, %v684
        %v741 = vpack.c.bf16 %v687, %v686
        %v742 = vpack.c.bf16 %v689, %v688
        %v743 = vpack.c.bf16 %v691, %v690
        %v744 = vpack.c.bf16 %v693, %v692
        %v745 = vpack.c.bf16 %v695, %v694
        %v746 = vpack.c.bf16 %v697, %v696
        %v747 = vld [vmem:[%s2] sm:$0x1]
        %v749 = vlaneseq
        %v750 = vshrl.u32 %v749, 7
        %v751 = vsub.s32 0, %v750
        %v752 = vrot.slane %v747, %v751
        %vm754 = vcmask 130048
        %v756 = vsel %vm754, %v599, 0
        %758 = vmatprep.subr.bf16.mxu0 0
        %759 = vmatpush1.bf16.msra.mxu0 %v698
        %760 = vmatprep.subr.bf16.mxu0 0
        %761 = vmatpush1.bf16.msra.mxu0 %v699
        %762 = vmatprep.subr.bf16.mxu0 0
        %763 = vmatpush1.bf16.msra.mxu0 %v700
        %764 = vmatprep.subr.bf16.mxu0 0
        %765 = vmatpush1.bf16.msra.mxu0 %v701
        %766 = vmatprep.subr.bf16.mxu0 0
        %767 = vmatpush1.bf16.msra.mxu0 %v702
        %768 = vmatprep.subr.bf16.mxu0 0
        %769 = vmatpush1.bf16.msra.mxu0 %v703
        %770 = vmatprep.subr.bf16.mxu0 0
        %771 = vmatpush1.bf16.msra.mxu0 %v704
        %772 = vmatprep.subr.bf16.mxu0 0
        %773 = vmatpush1.bf16.msra.mxu0 %v705
        %774 = vmatprep.subr.bf16.mxu0 0
        %775 = vmatpush1.bf16.msra.mxu0 %v706
        %776 = vmatprep.subr.bf16.mxu0 0
        %777 = vmatpush1.bf16.msra.mxu0 %v707
        %778 = vmatprep.subr.bf16.mxu0 0
        %779 = vmatpush1.bf16.msra.mxu0 %v708
        %780 = vmatprep.subr.bf16.mxu0 0
        %781 = vmatpush1.bf16.msra.mxu0 %v709
        %782 = vmatprep.subr.bf16.mxu0 0
        %783 = vmatpush1.bf16.msra.mxu0 %v710
        %784 = vmatprep.subr.bf16.mxu0 0
        %785 = vmatpush1.bf16.msra.mxu0 %v711
        %786 = vmatprep.subr.bf16.mxu0 0
        %787 = vmatpush1.bf16.msra.mxu0 %v712
        %788 = vmatprep.subr.bf16.mxu0 0
        %789 = vmatpush1.bf16.msra.mxu0 %v713
        %790 = vmatprep.mubr.bf16.mxu0 %v594
        %791 = vmatmul.mubr.bf16.gmra.mrb[0].mxu0 %v593
        %v792 = vpop.f32.mrb[0].mxu0
        %v793 = vadd.f32 %v752, %v792
        %v794 = vpop.f32.mrb[0].mxu0
        %v795 = vpop.f32.mrb[0].mxu0
        %v796 = vpop.f32.mrb[0].mxu0
        %797 = vdwg.mxu0
        %798 = vmatprep.subr.bf16.mxu0 0
        %799 = vmatpush1.bf16.msra.mxu0 %v714
        %800 = vmatprep.subr.bf16.mxu0 0
        %801 = vmatpush1.bf16.msra.mxu0 %v715
        %802 = vmatprep.subr.bf16.mxu0 0
        %803 = vmatpush1.bf16.msra.mxu0 %v716
        %804 = vmatprep.subr.bf16.mxu0 0
        %805 = vmatpush1.bf16.msra.mxu0 %v717
        %806 = vmatprep.subr.bf16.mxu0 0
        %807 = vmatpush1.bf16.msra.mxu0 %v718
        %808 = vmatprep.subr.bf16.mxu0 0
        %809 = vmatpush1.bf16.msra.mxu0 %v719
        %810 = vmatprep.subr.bf16.mxu0 0
        %811 = vmatpush1.bf16.msra.mxu0 %v720
        %812 = vmatprep.subr.bf16.mxu0 0
        %813 = vmatpush1.bf16.msra.mxu0 %v721
        %814 = vmatprep.subr.bf16.mxu0 0
        %815 = vmatpush1.bf16.msra.mxu0 %v722
        %816 = vmatprep.subr.bf16.mxu0 0
        %817 = vmatpush1.bf16.msra.mxu0 %v723
        %818 = vmatprep.subr.bf16.mxu0 0
        %819 = vmatpush1.bf16.msra.mxu0 %v724
        %820 = vmatprep.subr.bf16.mxu0 0
        %821 = vmatpush1.bf16.msra.mxu0 %v725
        %822 = vmatprep.subr.bf16.mxu0 0
        %823 = vmatpush1.bf16.msra.mxu0 %v726
        %824 = vmatprep.subr.bf16.mxu0 0
        %825 = vmatpush1.bf16.msra.mxu0 %v727
        %826 = vmatprep.subr.bf16.mxu0 0
        %827 = vmatpush1.bf16.msra.mxu0 %v728
        %828 = vmatprep.subr.bf16.mxu0 0
        %829 = vmatpush1.bf16.msra.mxu0 %v729
        %830 = vmatprep.mubr.bf16.mxu0 %v596
        %831 = vmatmul.mubr.bf16.gmra.mrb[0].mxu0 %v595
        %v832 = vpop.f32.mrb[0].mxu0
        %v833 = vadd.f32 %v793, %v832
        %v834 = vpop.f32.mrb[0].mxu0
        %v835 = vpop.f32.mrb[0].mxu0
        %v836 = vpop.f32.mrb[0].mxu0
        %837 = vdwg.mxu0
        %838 = vmatprep.subr.bf16.mxu0 0
        %839 = vmatpush1.bf16.msra.mxu0 %v730
        %840 = vmatprep.subr.bf16.mxu0 0
        %841 = vmatpush1.bf16.msra.mxu0 %v731
        %842 = vmatprep.subr.bf16.mxu0 0
        %843 = vmatpush1.bf16.msra.mxu0 %v732
        %844 = vmatprep.subr.bf16.mxu0 0
        %845 = vmatpush1.bf16.msra.mxu0 %v733
        %846 = vmatprep.subr.bf16.mxu0 0
        %847 = vmatpush1.bf16.msra.mxu0 %v734
        %848 = vmatprep.subr.bf16.mxu0 0
        %849 = vmatpush1.bf16.msra.mxu0 %v735
        %850 = vmatprep.subr.bf16.mxu0 0
        %851 = vmatpush1.bf16.msra.mxu0 %v736
        %852 = vmatprep.subr.bf16.mxu0 0
        %853 = vmatpush1.bf16.msra.mxu0 %v737
        %854 = vmatprep.subr.bf16.mxu0 0
        %855 = vmatpush1.bf16.msra.mxu0 %v738
        %856 = vmatprep.subr.bf16.mxu0 0
        %857 = vmatpush1.bf16.msra.mxu0 %v739
        %858 = vmatprep.subr.bf16.mxu0 0
        %859 = vmatpush1.bf16.msra.mxu0 %v740
        %860 = vmatprep.subr.bf16.mxu0 0
        %861 = vmatpush1.bf16.msra.mxu0 %v741
        %862 = vmatprep.subr.bf16.mxu0 0
        %863 = vmatpush1.bf16.msra.mxu0 %v742
        %864 = vmatprep.subr.bf16.mxu0 0
        %865 = vmatpush1.bf16.msra.mxu0 %v743
        %866 = vmatprep.subr.bf16.mxu0 0
        %867 = vmatpush1.bf16.msra.mxu0 %v744
        %868 = vmatprep.subr.bf16.mxu0 0
        %869 = vmatpush1.bf16.msra.mxu0 %v745
        %870 = vmatprep.mubr.bf16.mxu0 %v598
        %871 = vmatmul.mubr.bf16.gmra.mrb[0].mxu0 %v597
        %v872 = vpop.f32.mrb[0].mxu0
        %v873 = vadd.f32 %v833, %v872
        %v874 = vpop.f32.mrb[0].mxu0
        %v875 = vpop.f32.mrb[0].mxu0
        %v876 = vpop.f32.mrb[0].mxu0
        %877 = vdwg.mxu0
        %878 = vmatprep.subr.bf16.mxu0 0
        %879 = vmatpush1.bf16.msra.mxu0 %v746
        %880 = vmatprep.subr.bf16.mxu0 0
        %881 = vmatpush1.bf16.msra.mxu0 0
        %882 = vmatprep.subr.bf16.mxu0 0
        %883 = vmatpush1.bf16.msra.mxu0 0
        %884 = vmatprep.subr.bf16.mxu0 0
        %885 = vmatpush1.bf16.msra.mxu0 0
        %886 = vmatprep.subr.bf16.mxu0 0
        %887 = vmatpush1.bf16.msra.mxu0 0
        %888 = vmatprep.subr.bf16.mxu0 0
        %889 = vmatpush1.bf16.msra.mxu0 0
        %890 = vmatprep.subr.bf16.mxu0 0
        %891 = vmatpush1.bf16.msra.mxu0 0
        %892 = vmatprep.subr.bf16.mxu0 0
        %893 = vmatpush1.bf16.msra.mxu0 0
        %894 = vmatprep.subr.bf16.mxu0 0
        %895 = vmatpush1.bf16.msra.mxu0 0
        %896 = vmatprep.subr.bf16.mxu0 0
        %897 = vmatpush1.bf16.msra.mxu0 0
        %898 = vmatprep.subr.bf16.mxu0 0
        %899 = vmatpush1.bf16.msra.mxu0 0
        %900 = vmatprep.subr.bf16.mxu0 0
        %901 = vmatpush1.bf16.msra.mxu0 0
        %902 = vmatprep.subr.bf16.mxu0 0
        %903 = vmatpush1.bf16.msra.mxu0 0
        %904 = vmatprep.subr.bf16.mxu0 0
        %905 = vmatpush1.bf16.msra.mxu0 0
        %906 = vmatprep.subr.bf16.mxu0 0
        %907 = vmatpush1.bf16.msra.mxu0 0
        %908 = vmatprep.subr.bf16.mxu0 0
        %909 = vmatpush1.bf16.msra.mxu0 0
        %910 = vmatprep.mubr.bf16.mxu0 0
        %911 = vmatmul.mubr.bf16.gmra.mrb[0].mxu0 %v756
        %v912 = vpop.f32.mrb[0].mxu0
        %v913 = vadd.f32 %v873, %v912
        %v914 = vpop.f32.mrb[0].mxu0
        %v915 = vpop.f32.mrb[0].mxu0
        %v916 = vpop.f32.mrb[0].mxu0
        %917 = vdwg.mxu0
        %v918 = vtanh.pop %v913
        %v919 = vpack.c.bf16 %v918, %v918
        %v920 = vld [vmem:[%s3] sm:$0xff]
        %v921 = vld [vmem:[%s3 + $0x8] sm:$0xff]
        %v922 = vld [vmem:[%s3 + $0x10] sm:$0xff]
        %v923 = vld [vmem:[%s3 + $0x18] sm:$0xff]
        %v924 = vld [vmem:[%s3 + $0x20] sm:$0xff]
        %v925 = vld [vmem:[%s3 + $0x28] sm:$0xff]
        %v926 = vld [vmem:[%s3 + $0x30] sm:$0xff]
        %v927 = vld [vmem:[%s3 + $0x38] sm:$0xff]
        %v928 = vld [vmem:[%s3 + $0x40] sm:$0xff]
        %v929 = vld [vmem:[%s3 + $0x48] sm:$0xff]
        %v930 = vld [vmem:[%s3 + $0x50] sm:$0xff]
        %v931 = vld [vmem:[%s3 + $0x58] sm:$0xff]
        %v932 = vld [vmem:[%s3 + $0x60] sm:$0xff]
        %v933 = vld [vmem:[%s3 + $0x68] sm:$0xff]
        %v934 = vld [vmem:[%s3 + $0x70] sm:$0xff]
        %v935 = vld [vmem:[%s3 + $0x78] sm:$0xff]
        %v936 = vpack.c.bf16 %v921, %v920
        %v937 = vpack.c.bf16 %v923, %v922
        %v938 = vpack.c.bf16 %v925, %v924
        %v939 = vpack.c.bf16 %v927, %v926
        %v940 = vpack.c.bf16 %v929, %v928
        %v941 = vpack.c.bf16 %v931, %v930
        %v942 = vpack.c.bf16 %v933, %v932
        %v943 = vpack.c.bf16 %v935, %v934
        %v944 = vld [vmem:[%s4] sm:$0x1]
        %v946 = vlaneseq
        %v947 = vshrl.u32 %v946, 7
        %v948 = vsub.s32 0, %v947
        %v949 = vrot.slane %v944, %v948
        %951 = vmatprep.subr.bf16.mxu0 0
        %952 = vmatpush1.bf16.msra.mxu0 %v936
        %953 = vmatprep.subr.bf16.mxu0 0
        %954 = vmatpush1.bf16.msra.mxu0 %v937
        %955 = vmatprep.subr.bf16.mxu0 0
        %956 = vmatpush1.bf16.msra.mxu0 %v938
        %957 = vmatprep.subr.bf16.mxu0 0
        %958 = vmatpush1.bf16.msra.mxu0 %v939
        %959 = vmatprep.subr.bf16.mxu0 0
        %960 = vmatpush1.bf16.msra.mxu0 %v940
        %961 = vmatprep.subr.bf16.mxu0 0
        %962 = vmatpush1.bf16.msra.mxu0 %v941
        %963 = vmatprep.subr.bf16.mxu0 0
        %964 = vmatpush1.bf16.msra.mxu0 %v942
        %965 = vmatprep.subr.bf16.mxu0 0
        %966 = vmatpush1.bf16.msra.mxu0 %v943
        %967 = vmatprep.subr.bf16.mxu0 0
        %968 = vmatpush1.bf16.msra.mxu0 0
        %969 = vmatprep.subr.bf16.mxu0 0
        %970 = vmatpush1.bf16.msra.mxu0 0
        %971 = vmatprep.subr.bf16.mxu0 0
        %972 = vmatpush1.bf16.msra.mxu0 0
        %973 = vmatprep.subr.bf16.mxu0 0
        %974 = vmatpush1.bf16.msra.mxu0 0
        %975 = vmatprep.subr.bf16.mxu0 0
        %976 = vmatpush1.bf16.msra.mxu0 0
        %977 = vmatprep.subr.bf16.mxu0 0
        %978 = vmatpush1.bf16.msra.mxu0 0
        %979 = vmatprep.subr.bf16.mxu0 0
        %980 = vmatpush1.bf16.msra.mxu0 0
        %981 = vmatprep.subr.bf16.mxu0 0
        %982 = vmatpush1.bf16.msra.mxu0 0
        %983 = vmatprep.mubr.bf16.mxu0 0
        %984 = vmatmul.mubr.bf16.gmra.mrb[0].mxu0 %v919
        %v985 = vpop.f32.mrb[0].mxu0
        %v986 = vadd.f32 %v949, %v985
        %v987 = vpop.f32.mrb[0].mxu0
        %v988 = vpop.f32.mrb[0].mxu0
        %v989 = vpop.f32.mrb[0].mxu0
        %990 = vdwg.mxu0
        %v991 = vtanh.pop %v986
        %v992 = vpack.c.bf16 %v991, %v991
        %v993 = vld [vmem:[%s5] sm:$0xff]
        %v994 = vld [vmem:[%s5 + $0x8] sm:$0xff]
        %v995 = vld [vmem:[%s5 + $0x10] sm:$0xff]
        %v996 = vld [vmem:[%s5 + $0x18] sm:$0xff]
        %v997 = vld [vmem:[%s5 + $0x20] sm:$0xff]
        %v998 = vld [vmem:[%s5 + $0x28] sm:$0xff]
        %v999 = vld [vmem:[%s5 + $0x30] sm:$0xff]
        %v1000 = vld [vmem:[%s5 + $0x38] sm:$0xff]
        %v1001 = vld [vmem:[%s5 + $0x40] sm:$0xff]
        %v1002 = vld [vmem:[%s5 + $0x48] sm:$0xff]
        %v1003 = vld [vmem:[%s5 + $0x50] sm:$0xff]
        %v1004 = vld [vmem:[%s5 + $0x58] sm:$0xff]
        %v1005 = vld [vmem:[%s5 + $0x60] sm:$0xff]
        %v1006 = vld [vmem:[%s5 + $0x68] sm:$0xff]
        %v1007 = vld [vmem:[%s5 + $0x70] sm:$0xff]
        %v1008 = vld [vmem:[%s5 + $0x78] sm:$0xff]
        %v1009 = vpack.c.bf16 %v994, %v993
        %v1010 = vpack.c.bf16 %v996, %v995
        %v1011 = vpack.c.bf16 %v998, %v997
        %v1012 = vpack.c.bf16 %v1000, %v999
        %v1013 = vpack.c.bf16 %v1002, %v1001
        %v1014 = vpack.c.bf16 %v1004, %v1003
        %v1015 = vpack.c.bf16 %v1006, %v1005
        %v1016 = vpack.c.bf16 %v1008, %v1007
        %v1017 = vld [vmem:[%s6] sm:$0x1]
        %v1019 = vlaneseq
        %v1020 = vshrl.u32 %v1019, 7
        %v1021 = vsub.s32 0, %v1020
        %v1022 = vrot.slane %v1017, %v1021
        %1024 = vmatprep.subr.bf16.mxu0 0
        %1025 = vmatpush1.bf16.msra.mxu0 %v1009
        %1026 = vmatprep.subr.bf16.mxu0 0
        %1027 = vmatpush1.bf16.msra.mxu0 %v1010
        %1028 = vmatprep.subr.bf16.mxu0 0
        %1029 = vmatpush1.bf16.msra.mxu0 %v1011
        %1030 = vmatprep.subr.bf16.mxu0 0
        %1031 = vmatpush1.bf16.msra.mxu0 %v1012
        %1032 = vmatprep.subr.bf16.mxu0 0
        %1033 = vmatpush1.bf16.msra.mxu0 %v1013
        %1034 = vmatprep.subr.bf16.mxu0 0
        %1035 = vmatpush1.bf16.msra.mxu0 %v1014
        %1036 = vmatprep.subr.bf16.mxu0 0
        %1037 = vmatpush1.bf16.msra.mxu0 %v1015
        %1038 = vmatprep.subr.bf16.mxu0 0
        %1039 = vmatpush1.bf16.msra.mxu0 %v1016
        %1040 = vmatprep.subr.bf16.mxu0 0
        %1041 = vmatpush1.bf16.msra.mxu0 0
        %1042 = vmatprep.subr.bf16.mxu0 0
        %1043 = vmatpush1.bf16.msra.mxu0 0
        %1044 = vmatprep.subr.bf16.mxu0 0
        %1045 = vmatpush1.bf16.msra.mxu0 0
        %1046 = vmatprep.subr.bf16.mxu0 0
        %1047 = vmatpush1.bf16.msra.mxu0 0
        %1048 = vmatprep.subr.bf16.mxu0 0
        %1049 = vmatpush1.bf16.msra.mxu0 0
        %1050 = vmatprep.subr.bf16.mxu0 0
        %1051 = vmatpush1.bf16.msra.mxu0 0
        %1052 = vmatprep.subr.bf16.mxu0 0
        %1053 = vmatpush1.bf16.msra.mxu0 0
        %1054 = vmatprep.subr.bf16.mxu0 0
        %1055 = vmatpush1.bf16.msra.mxu0 0
        %1056 = vmatprep.mubr.bf16.mxu0 0
        %1057 = vmatmul.mubr.bf16.gmra.mrb[0].mxu0 %v992
        %v1058 = vpop.f32.mrb[0].mxu0
        %v1059 = vadd.f32 %v1022, %v1058
        %v1060 = vpop.f32.mrb[0].mxu0
        %v1061 = vpop.f32.mrb[0].mxu0
        %v1062 = vpop.f32.mrb[0].mxu0
        %1063 = vdwg.mxu0
        %v1064 = vtanh.pop %v1059
        %v1065 = vpack.c.bf16 %v1064, %v1064
        %v1066 = vld [vmem:[%s7] sm:$0xff]
        %v1067 = vld [vmem:[%s7 + $0x8] sm:$0xff]
        %v1068 = vld [vmem:[%s7 + $0x10] sm:$0xff]
        %v1069 = vld [vmem:[%s7 + $0x18] sm:$0xff]
        %v1070 = vld [vmem:[%s7 + $0x20] sm:$0xff]
        %v1071 = vld [vmem:[%s7 + $0x28] sm:$0xff]
        %v1072 = vld [vmem:[%s7 + $0x30] sm:$0xff]
        %v1073 = vld [vmem:[%s7 + $0x38] sm:$0xff]
        %v1074 = vld [vmem:[%s7 + $0x40] sm:$0xff]
        %v1075 = vld [vmem:[%s7 + $0x48] sm:$0xff]
        %v1076 = vld [vmem:[%s7 + $0x50] sm:$0xff]
        %v1077 = vld [vmem:[%s7 + $0x58] sm:$0xff]
        %v1078 = vld [vmem:[%s7 + $0x60] sm:$0xff]
        %v1079 = vld [vmem:[%s7 + $0x68] sm:$0xff]
        %v1080 = vld [vmem:[%s7 + $0x70] sm:$0xff]
        %v1081 = vld [vmem:[%s7 + $0x78] sm:$0xff]
        %v1082 = vpack.c.bf16 %v1067, %v1066
        %v1083 = vpack.c.bf16 %v1069, %v1068
        %v1084 = vpack.c.bf16 %v1071, %v1070
        %v1085 = vpack.c.bf16 %v1073, %v1072
        %v1086 = vpack.c.bf16 %v1075, %v1074
        %v1087 = vpack.c.bf16 %v1077, %v1076
        %v1088 = vpack.c.bf16 %v1079, %v1078
        %v1089 = vpack.c.bf16 %v1081, %v1080
        %v1090 = vld [vmem:[%s8] sm:$0x1]
        %v1092 = vlaneseq
        %v1093 = vshrl.u32 %v1092, 7
        %v1094 = vsub.s32 0, %v1093
        %v1095 = vrot.slane %v1090, %v1094
        %1097 = vmatprep.subr.bf16.mxu0 0
        %1098 = vmatpush1.bf16.msra.mxu0 %v1082
        %1099 = vmatprep.subr.bf16.mxu0 0
        %1100 = vmatpush1.bf16.msra.mxu0 %v1083
        %1101 = vmatprep.subr.bf16.mxu0 0
        %1102 = vmatpush1.bf16.msra.mxu0 %v1084
        %1103 = vmatprep.subr.bf16.mxu0 0
        %1104 = vmatpush1.bf16.msra.mxu0 %v1085
        %1105 = vmatprep.subr.bf16.mxu0 0
        %1106 = vmatpush1.bf16.msra.mxu0 %v1086
        %1107 = vmatprep.subr.bf16.mxu0 0
        %1108 = vmatpush1.bf16.msra.mxu0 %v1087
        %1109 = vmatprep.subr.bf16.mxu0 0
        %1110 = vmatpush1.bf16.msra.mxu0 %v1088
        %1111 = vmatprep.subr.bf16.mxu0 0
        %1112 = vmatpush1.bf16.msra.mxu0 %v1089
        %1113 = vmatprep.subr.bf16.mxu0 0
        %1114 = vmatpush1.bf16.msra.mxu0 0
        %1115 = vmatprep.subr.bf16.mxu0 0
        %1116 = vmatpush1.bf16.msra.mxu0 0
        %1117 = vmatprep.subr.bf16.mxu0 0
        %1118 = vmatpush1.bf16.msra.mxu0 0
        %1119 = vmatprep.subr.bf16.mxu0 0
        %1120 = vmatpush1.bf16.msra.mxu0 0
        %1121 = vmatprep.subr.bf16.mxu0 0
        %1122 = vmatpush1.bf16.msra.mxu0 0
        %1123 = vmatprep.subr.bf16.mxu0 0
        %1124 = vmatpush1.bf16.msra.mxu0 0
        %1125 = vmatprep.subr.bf16.mxu0 0
        %1126 = vmatpush1.bf16.msra.mxu0 0
        %1127 = vmatprep.subr.bf16.mxu0 0
        %1128 = vmatpush1.bf16.msra.mxu0 0
        %1129 = vmatprep.mubr.bf16.mxu0 0
        %1130 = vmatmul.mubr.bf16.gmra.mrb[0].mxu0 %v1065
        %v1131 = vpop.f32.mrb[0].mxu0
        %v1132 = vadd.f32 %v1095, %v1131
        %v1133 = vpop.f32.mrb[0].mxu0
        %v1134 = vpop.f32.mrb[0].mxu0
        %v1135 = vpop.f32.mrb[0].mxu0
        %1136 = vdwg.mxu0
        %vm1137 = vcmask 23552
        %1138 = vst.msk [vmem:[%s584] sm:$0xff] %vm1137, %v1132
        %v1139 = vpack.c.bf16 %v1132, %v1132
        %v1140 = vld [vmem:[%s9] sm:$0xff]
        %v1141 = vld [vmem:[%s9 + $0x8] sm:$0xff]
        %v1142 = vld [vmem:[%s9 + $0x10] sm:$0xff]
        %v1143 = vld [vmem:[%s9 + $0x18] sm:$0xff]
        %v1144 = vld [vmem:[%s9 + $0x20] sm:$0xff]
        %v1145 = vld [vmem:[%s9 + $0x28] sm:$0xff]
        %v1146 = vld [vmem:[%s9 + $0x30] sm:$0xff]
        %v1147 = vld [vmem:[%s9 + $0x38] sm:$0xff]
        %v1148 = vld [vmem:[%s9 + $0x40] sm:$0xff]
        %v1149 = vld [vmem:[%s9 + $0x48] sm:$0xff]
        %v1150 = vld [vmem:[%s9 + $0x50] sm:$0xff]
        %v1151 = vld [vmem:[%s9 + $0x58] sm:$0xff]
        %v1152 = vld [vmem:[%s9 + $0x60] sm:$0xff]
        %v1153 = vld [vmem:[%s9 + $0x68] sm:$0xff]
        %v1154 = vld [vmem:[%s9 + $0x70] sm:$0xff]
        %v1155 = vld [vmem:[%s9 + $0x78] sm:$0xff]
        %v1156 = vpack.c.bf16 %v1141, %v1140
        %v1157 = vpack.c.bf16 %v1143, %v1142
        %v1158 = vpack.c.bf16 %v1145, %v1144
        %v1159 = vpack.c.bf16 %v1147, %v1146
        %v1160 = vpack.c.bf16 %v1149, %v1148
        %v1161 = vpack.c.bf16 %v1151, %v1150
        %v1162 = vpack.c.bf16 %v1153, %v1152
        %v1163 = vpack.c.bf16 %v1155, %v1154
        %v1164 = vld [vmem:[%s10] sm:$0x1]
        %v1166 = vlaneseq
        %v1167 = vshrl.u32 %v1166, 7
        %v1168 = vsub.s32 0, %v1167
        %v1169 = vrot.slane %v1164, %v1168
        %1171 = vmatprep.subr.bf16.mxu0 0
        %1172 = vmatpush1.bf16.msra.mxu0 %v1156
        %1173 = vmatprep.subr.bf16.mxu0 0
        %1174 = vmatpush1.bf16.msra.mxu0 %v1157
        %1175 = vmatprep.subr.bf16.mxu0 0
        %1176 = vmatpush1.bf16.msra.mxu0 %v1158
        %1177 = vmatprep.subr.bf16.mxu0 0
        %1178 = vmatpush1.bf16.msra.mxu0 %v1159
        %1179 = vmatprep.subr.bf16.mxu0 0
        %1180 = vmatpush1.bf16.msra.mxu0 %v1160
        %1181 = vmatprep.subr.bf16.mxu0 0
        %1182 = vmatpush1.bf16.msra.mxu0 %v1161
        %1183 = vmatprep.subr.bf16.mxu0 0
        %1184 = vmatpush1.bf16.msra.mxu0 %v1162
        %1185 = vmatprep.subr.bf16.mxu0 0
        %1186 = vmatpush1.bf16.msra.mxu0 %v1163
        %1187 = vmatprep.subr.bf16.mxu0 0
        %1188 = vmatpush1.bf16.msra.mxu0 0
        %1189 = vmatprep.subr.bf16.mxu0 0
        %1190 = vmatpush1.bf16.msra.mxu0 0
        %1191 = vmatprep.subr.bf16.mxu0 0
        %1192 = vmatpush1.bf16.msra.mxu0 0
        %1193 = vmatprep.subr.bf16.mxu0 0
        %1194 = vmatpush1.bf16.msra.mxu0 0
        %1195 = vmatprep.subr.bf16.mxu0 0
        %1196 = vmatpush1.bf16.msra.mxu0 0
        %1197 = vmatprep.subr.bf16.mxu0 0
        %1198 = vmatpush1.bf16.msra.mxu0 0
        %1199 = vmatprep.subr.bf16.mxu0 0
        %1200 = vmatpush1.bf16.msra.mxu0 0
        %1201 = vmatprep.subr.bf16.mxu0 0
        %1202 = vmatpush1.bf16.msra.mxu0 0
        %1203 = vmatprep.mubr.bf16.mxu0 0
        %1204 = vmatmul.mubr.bf16.gmra.mrb[0].mxu0 %v1139
        %v1205 = vpop.f32.mrb[0].mxu0
        %v1206 = vadd.f32 %v1169, %v1205
        %v1207 = vpop.f32.mrb[0].mxu0
        %v1208 = vpop.f32.mrb[0].mxu0
        %v1209 = vpop.f32.mrb[0].mxu0
        %1210 = vdwg.mxu0
        %v1211 = vtanh.pop %v1206
        %v1212 = vpack.c.bf16 %v1211, %v1211
        %v1213 = vld [vmem:[%s11] sm:$0xff]
        %v1214 = vld [vmem:[%s11 + $0x8] sm:$0xff]
        %v1215 = vld [vmem:[%s11 + $0x10] sm:$0xff]
        %v1216 = vld [vmem:[%s11 + $0x18] sm:$0xff]
        %v1217 = vld [vmem:[%s11 + $0x20] sm:$0xff]
        %v1218 = vld [vmem:[%s11 + $0x28] sm:$0xff]
        %v1219 = vld [vmem:[%s11 + $0x30] sm:$0xff]
        %v1220 = vld [vmem:[%s11 + $0x38] sm:$0xff]
        %v1221 = vld [vmem:[%s11 + $0x40] sm:$0xff]
        %v1222 = vld [vmem:[%s11 + $0x48] sm:$0xff]
        %v1223 = vld [vmem:[%s11 + $0x50] sm:$0xff]
        %v1224 = vld [vmem:[%s11 + $0x58] sm:$0xff]
        %v1225 = vld [vmem:[%s11 + $0x60] sm:$0xff]
        %v1226 = vld [vmem:[%s11 + $0x68] sm:$0xff]
        %v1227 = vld [vmem:[%s11 + $0x70] sm:$0xff]
        %v1228 = vld [vmem:[%s11 + $0x78] sm:$0xff]
        %v1229 = vpack.c.bf16 %v1214, %v1213
        %v1230 = vpack.c.bf16 %v1216, %v1215
        %v1231 = vpack.c.bf16 %v1218, %v1217
        %v1232 = vpack.c.bf16 %v1220, %v1219
        %v1233 = vpack.c.bf16 %v1222, %v1221
        %v1234 = vpack.c.bf16 %v1224, %v1223
        %v1235 = vpack.c.bf16 %v1226, %v1225
        %v1236 = vpack.c.bf16 %v1228, %v1227
        %v1237 = vld [vmem:[%s12] sm:$0x1]
        %v1239 = vlaneseq
        %v1240 = vshrl.u32 %v1239, 7
        %v1241 = vsub.s32 0, %v1240
        %v1242 = vrot.slane %v1237, %v1241
        %1244 = vmatprep.subr.bf16.mxu0 0
        %1245 = vmatpush1.bf16.msra.mxu0 %v1229
        %1246 = vmatprep.subr.bf16.mxu0 0
        %1247 = vmatpush1.bf16.msra.mxu0 %v1230
        %1248 = vmatprep.subr.bf16.mxu0 0
        %1249 = vmatpush1.bf16.msra.mxu0 %v1231
        %1250 = vmatprep.subr.bf16.mxu0 0
        %1251 = vmatpush1.bf16.msra.mxu0 %v1232
        %1252 = vmatprep.subr.bf16.mxu0 0
        %1253 = vmatpush1.bf16.msra.mxu0 %v1233
        %1254 = vmatprep.subr.bf16.mxu0 0
        %1255 = vmatpush1.bf16.msra.mxu0 %v1234
        %1256 = vmatprep.subr.bf16.mxu0 0
        %1257 = vmatpush1.bf16.msra.mxu0 %v1235
        %1258 = vmatprep.subr.bf16.mxu0 0
        %1259 = vmatpush1.bf16.msra.mxu0 %v1236
        %1260 = vmatprep.subr.bf16.mxu0 0
        %1261 = vmatpush1.bf16.msra.mxu0 0
        %1262 = vmatprep.subr.bf16.mxu0 0
        %1263 = vmatpush1.bf16.msra.mxu0 0
        %1264 = vmatprep.subr.bf16.mxu0 0
        %1265 = vmatpush1.bf16.msra.mxu0 0
        %1266 = vmatprep.subr.bf16.mxu0 0
        %1267 = vmatpush1.bf16.msra.mxu0 0
        %1268 = vmatprep.subr.bf16.mxu0 0
        %1269 = vmatpush1.bf16.msra.mxu0 0
        %1270 = vmatprep.subr.bf16.mxu0 0
        %1271 = vmatpush1.bf16.msra.mxu0 0
        %1272 = vmatprep.subr.bf16.mxu0 0
        %1273 = vmatpush1.bf16.msra.mxu0 0
        %1274 = vmatprep.subr.bf16.mxu0 0
        %1275 = vmatpush1.bf16.msra.mxu0 0
        %1276 = vmatprep.mubr.bf16.mxu0 0
        %1277 = vmatmul.mubr.bf16.gmra.mrb[0].mxu0 %v1212
        %v1278 = vpop.f32.mrb[0].mxu0
        %v1279 = vadd.f32 %v1242, %v1278
        %v1280 = vpop.f32.mrb[0].mxu0
        %v1281 = vpop.f32.mrb[0].mxu0
        %v1282 = vpop.f32.mrb[0].mxu0
        %1283 = vdwg.mxu0
        %v1284 = vtanh.pop %v1279
        %v1285 = vpack.c.bf16 %v1284, %v1284
        %v1286 = vld [vmem:[%s13] sm:$0xff]
        %v1287 = vld [vmem:[%s13 + $0x8] sm:$0xff]
        %v1288 = vld [vmem:[%s13 + $0x10] sm:$0xff]
        %v1289 = vld [vmem:[%s13 + $0x18] sm:$0xff]
        %v1290 = vld [vmem:[%s13 + $0x20] sm:$0xff]
        %v1291 = vld [vmem:[%s13 + $0x28] sm:$0xff]
        %v1292 = vld [vmem:[%s13 + $0x30] sm:$0xff]
        %v1293 = vld [vmem:[%s13 + $0x38] sm:$0xff]
        %v1294 = vld [vmem:[%s13 + $0x40] sm:$0xff]
        %v1295 = vld [vmem:[%s13 + $0x48] sm:$0xff]
        %v1296 = vld [vmem:[%s13 + $0x50] sm:$0xff]
        %v1297 = vld [vmem:[%s13 + $0x58] sm:$0xff]
        %v1298 = vld [vmem:[%s13 + $0x60] sm:$0xff]
        %v1299 = vld [vmem:[%s13 + $0x68] sm:$0xff]
        %v1300 = vld [vmem:[%s13 + $0x70] sm:$0xff]
        %v1301 = vld [vmem:[%s13 + $0x78] sm:$0xff]
        %v1302 = vpack.c.bf16 %v1287, %v1286
        %v1303 = vpack.c.bf16 %v1289, %v1288
        %v1304 = vpack.c.bf16 %v1291, %v1290
        %v1305 = vpack.c.bf16 %v1293, %v1292
        %v1306 = vpack.c.bf16 %v1295, %v1294
        %v1307 = vpack.c.bf16 %v1297, %v1296
        %v1308 = vpack.c.bf16 %v1299, %v1298
        %v1309 = vpack.c.bf16 %v1301, %v1300
        %v1310 = vld [vmem:[%s14] sm:$0x1]
        %v1312 = vlaneseq
        %v1313 = vshrl.u32 %v1312, 7
        %v1314 = vsub.s32 0, %v1313
        %v1315 = vrot.slane %v1310, %v1314
        %1317 = vmatprep.subr.bf16.mxu0 0
        %1318 = vmatpush1.bf16.msra.mxu0 %v1302
        %1319 = vmatprep.subr.bf16.mxu0 0
        %1320 = vmatpush1.bf16.msra.mxu0 %v1303
        %1321 = vmatprep.subr.bf16.mxu0 0
        %1322 = vmatpush1.bf16.msra.mxu0 %v1304
        %1323 = vmatprep.subr.bf16.mxu0 0
        %1324 = vmatpush1.bf16.msra.mxu0 %v1305
        %1325 = vmatprep.subr.bf16.mxu0 0
        %1326 = vmatpush1.bf16.msra.mxu0 %v1306
        %1327 = vmatprep.subr.bf16.mxu0 0
        %1328 = vmatpush1.bf16.msra.mxu0 %v1307
        %1329 = vmatprep.subr.bf16.mxu0 0
        %1330 = vmatpush1.bf16.msra.mxu0 %v1308
        %1331 = vmatprep.subr.bf16.mxu0 0
        %1332 = vmatpush1.bf16.msra.mxu0 %v1309
        %1333 = vmatprep.subr.bf16.mxu0 0
        %1334 = vmatpush1.bf16.msra.mxu0 0
        %1335 = vmatprep.subr.bf16.mxu0 0
        %1336 = vmatpush1.bf16.msra.mxu0 0
        %1337 = vmatprep.subr.bf16.mxu0 0
        %1338 = vmatpush1.bf16.msra.mxu0 0
        %1339 = vmatprep.subr.bf16.mxu0 0
        %1340 = vmatpush1.bf16.msra.mxu0 0
        %1341 = vmatprep.subr.bf16.mxu0 0
        %1342 = vmatpush1.bf16.msra.mxu0 0
        %1343 = vmatprep.subr.bf16.mxu0 0
        %1344 = vmatpush1.bf16.msra.mxu0 0
        %1345 = vmatprep.subr.bf16.mxu0 0
        %1346 = vmatpush1.bf16.msra.mxu0 0
        %1347 = vmatprep.subr.bf16.mxu0 0
        %1348 = vmatpush1.bf16.msra.mxu0 0
        %1349 = vmatprep.mubr.bf16.mxu0 0
        %1350 = vmatmul.mubr.bf16.gmra.mrb[0].mxu0 %v1285
        %v1351 = vpop.f32.mrb[0].mxu0
        %v1352 = vadd.f32 %v1315, %v1351
        %v1353 = vpop.f32.mrb[0].mxu0
        %v1354 = vpop.f32.mrb[0].mxu0
        %v1355 = vpop.f32.mrb[0].mxu0
        %1356 = vdwg.mxu0
        %v1357 = vtanh.pop %v1352
        %v1358 = vpack.c.bf16 %v1357, %v1357
        %v1359 = vld [vmem:[%s15] sm:$0xff]
        %v1360 = vld [vmem:[%s15 + $0x8] sm:$0xff]
        %v1361 = vld [vmem:[%s15 + $0x10] sm:$0xff]
        %v1362 = vld [vmem:[%s15 + $0x18] sm:$0xff]
        %v1363 = vld [vmem:[%s15 + $0x20] sm:$0xff]
        %v1364 = vld [vmem:[%s15 + $0x28] sm:$0xff]
        %v1365 = vld [vmem:[%s15 + $0x30] sm:$0xff]
        %v1366 = vld [vmem:[%s15 + $0x38] sm:$0xff]
        %v1367 = vld [vmem:[%s15 + $0x40] sm:$0xff]
        %v1368 = vld [vmem:[%s15 + $0x48] sm:$0xff]
        %v1369 = vld [vmem:[%s15 + $0x50] sm:$0xff]
        %v1370 = vld [vmem:[%s15 + $0x58] sm:$0xff]
        %v1371 = vld [vmem:[%s15 + $0x60] sm:$0xff]
        %v1372 = vld [vmem:[%s15 + $0x68] sm:$0xff]
        %v1373 = vld [vmem:[%s15 + $0x70] sm:$0xff]
        %v1374 = vld [vmem:[%s15 + $0x78] sm:$0xff]
        %v1375 = vld [vmem:[%s15 + $0x80] sm:$0xff]
        %v1376 = vld [vmem:[%s15 + $0x88] sm:$0xff]
        %v1377 = vld [vmem:[%s15 + $0x90] sm:$0xff]
        %v1378 = vld [vmem:[%s15 + $0x98] sm:$0xff]
        %v1379 = vld [vmem:[%s15 + $0xa0] sm:$0xff]
        %v1380 = vld [vmem:[%s15 + $0xa8] sm:$0xff]
        %v1381 = vld [vmem:[%s15 + $0xb0] sm:$0xff]
        %v1382 = vld [vmem:[%s15 + $0xb8] sm:$0xff]
        %v1383 = vld [vmem:[%s15 + $0xc0] sm:$0xff]
        %v1384 = vld [vmem:[%s15 + $0xc8] sm:$0xff]
        %v1385 = vld [vmem:[%s15 + $0xd0] sm:$0xff]
        %v1386 = vld [vmem:[%s15 + $0xd8] sm:$0xff]
        %v1387 = vld [vmem:[%s15 + $0xe0] sm:$0xff]
        %v1388 = vld [vmem:[%s15 + $0xe8] sm:$0xff]
        %v1389 = vld [vmem:[%s15 + $0xf0] sm:$0xff]
        %v1390 = vld [vmem:[%s15 + $0xf8] sm:$0xff]
        %v1391 = vld [vmem:[%s15 + $0x100] sm:$0xff]
        %v1392 = vld [vmem:[%s15 + $0x108] sm:$0xff]
        %v1393 = vld [vmem:[%s15 + $0x110] sm:$0xff]
        %v1394 = vld [vmem:[%s15 + $0x118] sm:$0xff]
        %v1395 = vld [vmem:[%s15 + $0x120] sm:$0xff]
        %v1396 = vld [vmem:[%s15 + $0x128] sm:$0xff]
        %v1397 = vld [vmem:[%s15 + $0x130] sm:$0xff]
        %v1398 = vld [vmem:[%s15 + $0x138] sm:$0xff]
        %v1399 = vld [vmem:[%s15 + $0x140] sm:$0xff]
        %v1400 = vld [vmem:[%s15 + $0x148] sm:$0xff]
        %v1401 = vld [vmem:[%s15 + $0x150] sm:$0xff]
        %v1402 = vld [vmem:[%s15 + $0x158] sm:$0xff]
        %v1403 = vld [vmem:[%s15 + $0x160] sm:$0xff]
        %v1404 = vld [vmem:[%s15 + $0x168] sm:$0xff]
        %v1405 = vld [vmem:[%s15 + $0x170] sm:$0xff]
        %v1406 = vld [vmem:[%s15 + $0x178] sm:$0xff]
        %v1407 = vld [vmem:[%s15 + $0x180] sm:$0xff]
        %v1408 = vld [vmem:[%s15 + $0x188] sm:$0xff]
        %v1409 = vld [vmem:[%s15 + $0x190] sm:$0xff]
        %v1410 = vld [vmem:[%s15 + $0x198] sm:$0xff]
        %v1411 = vld [vmem:[%s15 + $0x1a0] sm:$0xff]
        %v1412 = vld [vmem:[%s15 + $0x1a8] sm:$0xff]
        %v1413 = vld [vmem:[%s15 + $0x1b0] sm:$0xff]
        %v1414 = vld [vmem:[%s15 + $0x1b8] sm:$0xff]
        %v1415 = vld [vmem:[%s15 + $0x1c0] sm:$0xff]
        %v1416 = vld [vmem:[%s15 + $0x1c8] sm:$0xff]
        %v1417 = vld [vmem:[%s15 + $0x1d0] sm:$0xff]
        %v1418 = vld [vmem:[%s15 + $0x1d8] sm:$0xff]
        %v1419 = vld [vmem:[%s15 + $0x1e0] sm:$0xff]
        %v1420 = vld [vmem:[%s15 + $0x1e8] sm:$0xff]
        %v1421 = vld [vmem:[%s15 + $0x1f0] sm:$0xff]
        %v1422 = vld [vmem:[%s15 + $0x1f8] sm:$0xff]
        %v1423 = vld [vmem:[%s15 + $0x200] sm:$0xff]
        %v1424 = vld [vmem:[%s15 + $0x208] sm:$0xff]
        %v1425 = vld [vmem:[%s15 + $0x210] sm:$0xff]
        %v1426 = vld [vmem:[%s15 + $0x218] sm:$0xff]
        %v1427 = vld [vmem:[%s15 + $0x220] sm:$0xff]
        %v1428 = vld [vmem:[%s15 + $0x228] sm:$0xff]
        %v1429 = vld [vmem:[%s15 + $0x230] sm:$0xff]
        %v1430 = vld [vmem:[%s15 + $0x238] sm:$0xff]
        %v1431 = vld [vmem:[%s15 + $0x240] sm:$0xff]
        %v1432 = vld [vmem:[%s15 + $0x248] sm:$0xff]
        %v1433 = vld [vmem:[%s15 + $0x250] sm:$0xff]
        %v1434 = vld [vmem:[%s15 + $0x258] sm:$0xff]
        %v1435 = vld [vmem:[%s15 + $0x260] sm:$0xff]
        %v1436 = vld [vmem:[%s15 + $0x268] sm:$0xff]
        %v1437 = vld [vmem:[%s15 + $0x270] sm:$0xff]
        %v1438 = vld [vmem:[%s15 + $0x278] sm:$0xff]
        %v1439 = vld [vmem:[%s15 + $0x280] sm:$0xff]
        %v1440 = vld [vmem:[%s15 + $0x288] sm:$0xff]
        %v1441 = vld [vmem:[%s15 + $0x290] sm:$0xff]
        %v1442 = vld [vmem:[%s15 + $0x298] sm:$0xff]
        %v1443 = vld [vmem:[%s15 + $0x2a0] sm:$0xff]
        %v1444 = vld [vmem:[%s15 + $0x2a8] sm:$0xff]
        %v1445 = vld [vmem:[%s15 + $0x2b0] sm:$0xff]
        %v1446 = vld [vmem:[%s15 + $0x2b8] sm:$0xff]
        %v1447 = vld [vmem:[%s15 + $0x2c0] sm:$0xff]
        %v1448 = vld [vmem:[%s15 + $0x2c8] sm:$0xff]
        %v1449 = vld [vmem:[%s15 + $0x2d0] sm:$0xff]
        %v1450 = vld [vmem:[%s15 + $0x2d8] sm:$0xff]
        %v1451 = vld [vmem:[%s15 + $0x2e0] sm:$0xff]
        %v1452 = vld [vmem:[%s15 + $0x2e8] sm:$0xff]
        %v1453 = vld [vmem:[%s15 + $0x2f0] sm:$0xff]
        %v1454 = vld [vmem:[%s15 + $0x2f8] sm:$0xff]
        %v1455 = vld [vmem:[%s15 + $0x300] sm:$0xff]
        %v1456 = vld [vmem:[%s15 + $0x308] sm:$0xff]
        %v1457 = vld [vmem:[%s15 + $0x310] sm:$0xff]
        %v1458 = vld [vmem:[%s15 + $0x318] sm:$0xff]
        %v1459 = vld [vmem:[%s15 + $0x320] sm:$0xff]
        %v1460 = vld [vmem:[%s15 + $0x328] sm:$0xff]
        %v1461 = vld [vmem:[%s15 + $0x330] sm:$0xff]
        %v1462 = vld [vmem:[%s15 + $0x338] sm:$0xff]
        %v1463 = vld [vmem:[%s15 + $0x340] sm:$0xff]
        %v1464 = vld [vmem:[%s15 + $0x348] sm:$0xff]
        %v1465 = vld [vmem:[%s15 + $0x350] sm:$0xff]
        %v1466 = vld [vmem:[%s15 + $0x358] sm:$0xff]
        %v1467 = vld [vmem:[%s15 + $0x360] sm:$0xff]
        %v1468 = vld [vmem:[%s15 + $0x368] sm:$0xff]
        %v1469 = vld [vmem:[%s15 + $0x370] sm:$0xff]
        %v1470 = vld [vmem:[%s15 + $0x378] sm:$0xff]
        %v1471 = vpack.c.bf16 %v1366, %v1359
        %v1472 = vpack.c.bf16 %v1367, %v1360
        %v1473 = vpack.c.bf16 %v1368, %v1361
        %v1474 = vpack.c.bf16 %v1369, %v1362
        %v1475 = vpack.c.bf16 %v1370, %v1363
        %v1476 = vpack.c.bf16 %v1371, %v1364
        %v1477 = vpack.c.bf16 %v1372, %v1365
        %v1478 = vpack.c.bf16 %v1380, %v1373
        %v1479 = vpack.c.bf16 %v1381, %v1374
        %v1480 = vpack.c.bf16 %v1382, %v1375
        %v1481 = vpack.c.bf16 %v1383, %v1376
        %v1482 = vpack.c.bf16 %v1384, %v1377
        %v1483 = vpack.c.bf16 %v1385, %v1378
        %v1484 = vpack.c.bf16 %v1386, %v1379
        %v1485 = vpack.c.bf16 %v1394, %v1387
        %v1486 = vpack.c.bf16 %v1395, %v1388
        %v1487 = vpack.c.bf16 %v1396, %v1389
        %v1488 = vpack.c.bf16 %v1397, %v1390
        %v1489 = vpack.c.bf16 %v1398, %v1391
        %v1490 = vpack.c.bf16 %v1399, %v1392
        %v1491 = vpack.c.bf16 %v1400, %v1393
        %v1492 = vpack.c.bf16 %v1408, %v1401
        %v1493 = vpack.c.bf16 %v1409, %v1402
        %v1494 = vpack.c.bf16 %v1410, %v1403
        %v1495 = vpack.c.bf16 %v1411, %v1404
        %v1496 = vpack.c.bf16 %v1412, %v1405
        %v1497 = vpack.c.bf16 %v1413, %v1406
        %v1498 = vpack.c.bf16 %v1414, %v1407
        %v1499 = vpack.c.bf16 %v1422, %v1415
        %v1500 = vpack.c.bf16 %v1423, %v1416
        %v1501 = vpack.c.bf16 %v1424, %v1417
        %v1502 = vpack.c.bf16 %v1425, %v1418
        %v1503 = vpack.c.bf16 %v1426, %v1419
        %v1504 = vpack.c.bf16 %v1427, %v1420
        %v1505 = vpack.c.bf16 %v1428, %v1421
        %v1506 = vpack.c.bf16 %v1436, %v1429
        %v1507 = vpack.c.bf16 %v1437, %v1430
        %v1508 = vpack.c.bf16 %v1438, %v1431
        %v1509 = vpack.c.bf16 %v1439, %v1432
        %v1510 = vpack.c.bf16 %v1440, %v1433
        %v1511 = vpack.c.bf16 %v1441, %v1434
        %v1512 = vpack.c.bf16 %v1442, %v1435
        %v1513 = vpack.c.bf16 %v1450, %v1443
        %v1514 = vpack.c.bf16 %v1451, %v1444
        %v1515 = vpack.c.bf16 %v1452, %v1445
        %v1516 = vpack.c.bf16 %v1453, %v1446
        %v1517 = vpack.c.bf16 %v1454, %v1447
        %v1518 = vpack.c.bf16 %v1455, %v1448
        %v1519 = vpack.c.bf16 %v1456, %v1449
        %v1520 = vpack.c.bf16 %v1464, %v1457
        %v1521 = vpack.c.bf16 %v1465, %v1458
        %v1522 = vpack.c.bf16 %v1466, %v1459
        %v1523 = vpack.c.bf16 %v1467, %v1460
        %v1524 = vpack.c.bf16 %v1468, %v1461
        %v1525 = vpack.c.bf16 %v1469, %v1462
        %v1526 = vpack.c.bf16 %v1470, %v1463
        %v1527 = vld [vmem:[%s16] sm:$0x7f]
        %v1529 = vlaneseq
        %v1530 = vshrl.u32 %v1529, 7
        %v1531 = vsub.s32 0, %v1530
        %v1532 = vrot.slane %v1527, %v1531
        %v1533 = vlaneseq
        %v1534 = vshrl.u32 %v1533, 7
        %v1535 = vsub.s32 1, %v1534
        %v1536 = vrot.slane %v1527, %v1535
        %v1537 = vlaneseq
        %v1538 = vshrl.u32 %v1537, 7
        %v1539 = vsub.s32 2, %v1538
        %v1540 = vrot.slane %v1527, %v1539
        %v1541 = vlaneseq
        %v1542 = vshrl.u32 %v1541, 7
        %v1543 = vsub.s32 3, %v1542
        %v1544 = vrot.slane %v1527, %v1543
        %v1545 = vlaneseq
        %v1546 = vshrl.u32 %v1545, 7
        %v1547 = vsub.s32 4, %v1546
        %v1548 = vrot.slane %v1527, %v1547
        %v1549 = vlaneseq
        %v1550 = vshrl.u32 %v1549, 7
        %v1551 = vsub.s32 5, %v1550
        %v1552 = vrot.slane %v1527, %v1551
        %v1553 = vlaneseq
        %v1554 = vshrl.u32 %v1553, 7
        %v1555 = vsub.s32 6, %v1554
        %v1556 = vrot.slane %v1527, %v1555
        %1564 = vmatprep.subr.bf16.mxu0 %v1472
        %1565 = vmatpush1.bf16.msra.mxu0 %v1471
        %1566 = vmatprep.subr.bf16.mxu0 %v1479
        %1567 = vmatpush1.bf16.msra.mxu0 %v1478
        %1568 = vmatprep.subr.bf16.mxu0 %v1486
        %1569 = vmatpush1.bf16.msra.mxu0 %v1485
        %1570 = vmatprep.subr.bf16.mxu0 %v1493
        %1571 = vmatpush1.bf16.msra.mxu0 %v1492
        %1572 = vmatprep.subr.bf16.mxu0 %v1500
        %1573 = vmatpush1.bf16.msra.mxu0 %v1499
        %1574 = vmatprep.subr.bf16.mxu0 %v1507
        %1575 = vmatpush1.bf16.msra.mxu0 %v1506
        %1576 = vmatprep.subr.bf16.mxu0 %v1514
        %1577 = vmatpush1.bf16.msra.mxu0 %v1513
        %1578 = vmatprep.subr.bf16.mxu0 %v1521
        %1579 = vmatpush1.bf16.msra.mxu0 %v1520
        %1580 = vmatprep.subr.bf16.mxu0 0
        %1581 = vmatpush1.bf16.msra.mxu0 0
        %1582 = vmatprep.subr.bf16.mxu0 0
        %1583 = vmatpush1.bf16.msra.mxu0 0
        %1584 = vmatprep.subr.bf16.mxu0 0
        %1585 = vmatpush1.bf16.msra.mxu0 0
        %1586 = vmatprep.subr.bf16.mxu0 0
        %1587 = vmatpush1.bf16.msra.mxu0 0
        %1588 = vmatprep.subr.bf16.mxu0 0
        %1589 = vmatpush1.bf16.msra.mxu0 0
        %1590 = vmatprep.subr.bf16.mxu0 0
        %1591 = vmatpush1.bf16.msra.mxu0 0
        %1592 = vmatprep.subr.bf16.mxu0 0
        %1593 = vmatpush1.bf16.msra.mxu0 0
        %1594 = vmatprep.subr.bf16.mxu0 0
        %1595 = vmatpush1.bf16.msra.mxu0 0
        %1596 = vmatprep.mubr.bf16.mxu0 0
        %1597 = vmatmul.mubr.bf16.gmra.mrb[0].mxu0 %v1358
        %v1598 = vpop.f32.mrb[0].mxu0
        %v1599 = vadd.f32 %v1532, %v1598
        %v1600 = vpop.f32.mrb[0].mxu0
        %v1601 = vadd.f32 %v1536, %v1600
        %v1602 = vpop.f32.mrb[0].mxu0
        %v1603 = vpop.f32.mrb[0].mxu0
        %1604 = vdwg.mxu0
        %1605 = vmatprep.subr.bf16.mxu0 %v1474
        %1606 = vmatpush1.bf16.msra.mxu0 %v1473
        %1607 = vmatprep.subr.bf16.mxu0 %v1481
        %1608 = vmatpush1.bf16.msra.mxu0 %v1480
        %1609 = vmatprep.subr.bf16.mxu0 %v1488
        %1610 = vmatpush1.bf16.msra.mxu0 %v1487
        %1611 = vmatprep.subr.bf16.mxu0 %v1495
        %1612 = vmatpush1.bf16.msra.mxu0 %v1494
        %1613 = vmatprep.subr.bf16.mxu0 %v1502
        %1614 = vmatpush1.bf16.msra.mxu0 %v1501
        %1615 = vmatprep.subr.bf16.mxu0 %v1509
        %1616 = vmatpush1.bf16.msra.mxu0 %v1508
        %1617 = vmatprep.subr.bf16.mxu0 %v1516
        %1618 = vmatpush1.bf16.msra.mxu0 %v1515
        %1619 = vmatprep.subr.bf16.mxu0 %v1523
        %1620 = vmatpush1.bf16.msra.mxu0 %v1522
        %1621 = vmatprep.subr.bf16.mxu0 0
        %1622 = vmatpush1.bf16.msra.mxu0 0
        %1623 = vmatprep.subr.bf16.mxu0 0
        %1624 = vmatpush1.bf16.msra.mxu0 0
        %1625 = vmatprep.subr.bf16.mxu0 0
        %1626 = vmatpush1.bf16.msra.mxu0 0
        %1627 = vmatprep.subr.bf16.mxu0 0
        %1628 = vmatpush1.bf16.msra.mxu0 0
        %1629 = vmatprep.subr.bf16.mxu0 0
        %1630 = vmatpush1.bf16.msra.mxu0 0
        %1631 = vmatprep.subr.bf16.mxu0 0
        %1632 = vmatpush1.bf16.msra.mxu0 0
        %1633 = vmatprep.subr.bf16.mxu0 0
        %1634 = vmatpush1.bf16.msra.mxu0 0
        %1635 = vmatprep.subr.bf16.mxu0 0
        %1636 = vmatpush1.bf16.msra.mxu0 0
        %1637 = vmatprep.mubr.bf16.mxu0 0
        %1638 = vmatmul.mubr.bf16.gmra.mrb[0].mxu0 %v1358
        %v1639 = vpop.f32.mrb[0].mxu0
        %v1640 = vadd.f32 %v1540, %v1639
        %v1641 = vpop.f32.mrb[0].mxu0
        %v1642 = vadd.f32 %v1544, %v1641
        %v1643 = vpop.f32.mrb[0].mxu0
        %v1644 = vpop.f32.mrb[0].mxu0
        %1645 = vdwg.mxu0
        %1646 = vmatprep.subr.bf16.mxu0 %v1476
        %1647 = vmatpush1.bf16.msra.mxu0 %v1475
        %1648 = vmatprep.subr.bf16.mxu0 %v1483
        %1649 = vmatpush1.bf16.msra.mxu0 %v1482
        %1650 = vmatprep.subr.bf16.mxu0 %v1490
        %1651 = vmatpush1.bf16.msra.mxu0 %v1489
        %1652 = vmatprep.subr.bf16.mxu0 %v1497
        %1653 = vmatpush1.bf16.msra.mxu0 %v1496
        %1654 = vmatprep.subr.bf16.mxu0 %v1504
        %1655 = vmatpush1.bf16.msra.mxu0 %v1503
        %1656 = vmatprep.subr.bf16.mxu0 %v1511
        %1657 = vmatpush1.bf16.msra.mxu0 %v1510
        %1658 = vmatprep.subr.bf16.mxu0 %v1518
        %1659 = vmatpush1.bf16.msra.mxu0 %v1517
        %1660 = vmatprep.subr.bf16.mxu0 %v1525
        %1661 = vmatpush1.bf16.msra.mxu0 %v1524
        %1662 = vmatprep.subr.bf16.mxu0 0
        %1663 = vmatpush1.bf16.msra.mxu0 0
        %1664 = vmatprep.subr.bf16.mxu0 0
        %1665 = vmatpush1.bf16.msra.mxu0 0
        %1666 = vmatprep.subr.bf16.mxu0 0
        %1667 = vmatpush1.bf16.msra.mxu0 0
        %1668 = vmatprep.subr.bf16.mxu0 0
        %1669 = vmatpush1.bf16.msra.mxu0 0
        %1670 = vmatprep.subr.bf16.mxu0 0
        %1671 = vmatpush1.bf16.msra.mxu0 0
        %1672 = vmatprep.subr.bf16.mxu0 0
        %1673 = vmatpush1.bf16.msra.mxu0 0
        %1674 = vmatprep.subr.bf16.mxu0 0
        %1675 = vmatpush1.bf16.msra.mxu0 0
        %1676 = vmatprep.subr.bf16.mxu0 0
        %1677 = vmatpush1.bf16.msra.mxu0 0
        %1678 = vmatprep.mubr.bf16.mxu0 0
        %1679 = vmatmul.mubr.bf16.gmra.mrb[0].mxu0 %v1358
        %v1680 = vpop.f32.mrb[0].mxu0
        %v1681 = vadd.f32 %v1548, %v1680
        %v1682 = vpop.f32.mrb[0].mxu0
        %v1683 = vadd.f32 %v1552, %v1682
        %v1684 = vpop.f32.mrb[0].mxu0
        %v1685 = vpop.f32.mrb[0].mxu0
        %1686 = vdwg.mxu0
        %1687 = vmatprep.subr.bf16.mxu0 0
        %1688 = vmatpush1.bf16.msra.mxu0 %v1477
        %1689 = vmatprep.subr.bf16.mxu0 0
        %1690 = vmatpush1.bf16.msra.mxu0 %v1484
        %1691 = vmatprep.subr.bf16.mxu0 0
        %1692 = vmatpush1.bf16.msra.mxu0 %v1491
        %1693 = vmatprep.subr.bf16.mxu0 0
        %1694 = vmatpush1.bf16.msra.mxu0 %v1498
        %1695 = vmatprep.subr.bf16.mxu0 0
        %1696 = vmatpush1.bf16.msra.mxu0 %v1505
        %1697 = vmatprep.subr.bf16.mxu0 0
        %1698 = vmatpush1.bf16.msra.mxu0 %v1512
        %1699 = vmatprep.subr.bf16.mxu0 0
        %1700 = vmatpush1.bf16.msra.mxu0 %v1519
        %1701 = vmatprep.subr.bf16.mxu0 0
        %1702 = vmatpush1.bf16.msra.mxu0 %v1526
        %1703 = vmatprep.subr.bf16.mxu0 0
        %1704 = vmatpush1.bf16.msra.mxu0 0
        %1705 = vmatprep.subr.bf16.mxu0 0
        %1706 = vmatpush1.bf16.msra.mxu0 0
        %1707 = vmatprep.subr.bf16.mxu0 0
        %1708 = vmatpush1.bf16.msra.mxu0 0
        %1709 = vmatprep.subr.bf16.mxu0 0
        %1710 = vmatpush1.bf16.msra.mxu0 0
        %1711 = vmatprep.subr.bf16.mxu0 0
        %1712 = vmatpush1.bf16.msra.mxu0 0
        %1713 = vmatprep.subr.bf16.mxu0 0
        %1714 = vmatpush1.bf16.msra.mxu0 0
        %1715 = vmatprep.subr.bf16.mxu0 0
        %1716 = vmatpush1.bf16.msra.mxu0 0
        %1717 = vmatprep.subr.bf16.mxu0 0
        %1718 = vmatpush1.bf16.msra.mxu0 0
        %1719 = vmatprep.mubr.bf16.mxu0 0
        %1720 = vmatmul.mubr.bf16.gmra.mrb[0].mxu0 %v1358
        %v1721 = vpop.f32.mrb[0].mxu0
        %v1722 = vadd.f32 %v1556, %v1721
        %v1723 = vpop.f32.mrb[0].mxu0
        %v1724 = vpop.f32.mrb[0].mxu0
        %v1725 = vpop.f32.mrb[0].mxu0
        %1726 = vdwg.mxu0
        %v1727 = vxor.u32 %v1599, 2147483648
        %v1728 = vxor.u32 %v1601, 2147483648
        %v1729 = vxor.u32 %v1640, 2147483648
        %v1730 = vxor.u32 %v1642, 2147483648
        %v1731 = vxor.u32 %v1681, 2147483648
        %v1732 = vxor.u32 %v1683, 2147483648
        %v1733 = vxor.u32 %v1722, 2147483648
        %v1734 = vmul.f32 %v1727, 1.442695
        %v1735 = vpow.pop %v1734
        %v1736 = vmul.f32 %v1728, 1.442695
        %v1737 = vpow.pop %v1736
        %v1738 = vmul.f32 %v1729, 1.442695
        %v1739 = vpow.pop %v1738
        %v1740 = vmul.f32 %v1730, 1.442695
        %v1741 = vpow.pop %v1740
        %v1742 = vmul.f32 %v1731, 1.442695
        %v1743 = vpow.pop %v1742
        %v1744 = vmul.f32 %v1732, 1.442695
        %v1745 = vpow.pop %v1744
        %v1746 = vmul.f32 %v1733, 1.442695
        %v1747 = vpow.pop %v1746
        %v1748 = vadd.f32 %v1735, 1.0
        %v1749 = vadd.f32 %v1737, 1.0
        %v1750 = vadd.f32 %v1739, 1.0
        %v1751 = vadd.f32 %v1741, 1.0
        %v1752 = vadd.f32 %v1743, 1.0
        %v1753 = vadd.f32 %v1745, 1.0
        %v1754 = vadd.f32 %v1747, 1.0
        %v1755 = vrcp.pop %v1748
        %v1756 = vmul.f32 1.0, %v1755
        %v1757 = vrcp.pop %v1749
        %v1758 = vmul.f32 1.0, %v1757
        %v1759 = vrcp.pop %v1750
        %v1760 = vmul.f32 1.0, %v1759
        %v1761 = vrcp.pop %v1751
        %v1762 = vmul.f32 1.0, %v1761
        %v1763 = vrcp.pop %v1752
        %v1764 = vmul.f32 1.0, %v1763
        %v1765 = vrcp.pop %v1753
        %v1766 = vmul.f32 1.0, %v1765
        %v1767 = vrcp.pop %v1754
        %v1768 = vmul.f32 1.0, %v1767
        %1769 = vst [vmem:[%s575] sm:$0xff] %v1756
        %1770 = vst [vmem:[%s575 + $0x8] sm:$0xff] %v1758
        %1771 = vst [vmem:[%s575 + $0x10] sm:$0xff] %v1760
        %1772 = vst [vmem:[%s575 + $0x18] sm:$0xff] %v1762
        %1773 = vst [vmem:[%s575 + $0x20] sm:$0xff] %v1764
        %1774 = vst [vmem:[%s575 + $0x28] sm:$0xff] %v1766
        %1775 = vst.msk [vmem:[%s575 + $0x30] sm:$0xff] %vm754, %v1768
        %p1776 = scmp.lt.s32.totalorder %s33, 1
        %s1777 = scalar_select %p1776, %s33, 1
        %s1778 = smul.addr %s1777, 8
        %s1779 = scalar_lea.vmem %s17, %s1778
        %s1780 = sand.u32 %s429, 1
        %s1781 = scalar_lea.sflag [#allocation3], %s1780
        %s1782 = sand.u32 %s429, 1
        %s1783 = smul.addr %s1782, 56
        %s1784 = scalar_lea.vmem [#allocation2], %s1783
        // Predicated region
        $region89: #{tpu_custom_call.1} parent=87 // pred_check
          %p1785 = pneg %p413
        $region90: #{tpu_custom_call.1} parent=87 // pred_check_branch
          %1787 = sbr.rel (%p1785) target = $region92
        $region91: #{tpu_custom_call.1} parent=87 // pred_region
          _
        $region92: #{tpu_custom_call.1} parent=87 // pred_fallthru
          _
        // Predicated region
        $region93: #{tpu_custom_call.1} parent=87 // pred_check
          %p1788 = pneg %p439
        $region94: #{tpu_custom_call.1} parent=87 // pred_check_branch
          %1790 = sbr.rel (%p1788) target = $region96
        $region95: #{tpu_custom_call.1} parent=87 // pred_region
          %s1792 = ssub.s32 896, 896
          %1793 = vsyncadd %s1781, %s1792
          %s1794 = smul.addr %s33, 7
          %s1795 = smul.addr %s1794, 128
          %s1796 = scalar_lea.hbm %s18, %s1795
          %s1798 = sshll.u32 %s1784, 4
          %s1799 = int_to_ptr.vmem [resolvable:$true] %s1798
          %1801 = dma.vmem_to_hbm [thread:$0]  %s1799, 896, %s1796, %s1781
        $region96: #{tpu_custom_call.1} parent=87 // pred_fallthru
          _
      $region88: #{tpu_custom_call.1} parent=5 // pred_fallthru
        _
      %p1802 = scmp.le.s32.totalorder 2, %s28
      // Predicated region
      $region97: #{tpu_custom_call.1} parent=5 // pred_check
        %p1803 = pneg %p1802
      $region98: #{tpu_custom_call.1} parent=5 // pred_check_branch
        %1805 = sbr.rel (%p1803) target = $region100
      $region99: #{tpu_custom_call.1} parent=5 // pred_region
        %s1806 = ssub.s32 %s28, 2
        // Predicated region
        $region101: #{tpu_custom_call.1} parent=99 // pred_check
          %p1807 = pneg %p419
        $region102: #{tpu_custom_call.1} parent=99 // pred_check_branch
          %1809 = sbr.rel (%p1807) target = $region104
        $region103: #{tpu_custom_call.1} parent=99 // pred_region
          %p1810 = scmp.lt.s32.totalorder %s34, 1
          %s1811 = scalar_select %p1810, %s34, 1
          %s1812 = smul.addr %s1811, 8
          %s1813 = scalar_lea.vmem %s17, %s1812
        $region104: #{tpu_custom_call.1} parent=99 // pred_fallthru
          _
        // Predicated region
        $region105: #{tpu_custom_call.1} parent=99 // pred_check
          %p1814 = pneg %p445
        $region106: #{tpu_custom_call.1} parent=99 // pred_check_branch
          %1816 = sbr.rel (%p1814) target = $region108
        $region107: #{tpu_custom_call.1} parent=99 // pred_region
          %s1817 = sand.u32 %s430, 1
          %s1818 = scalar_lea.sflag [#allocation3], %s1817
          %s1819 = sand.u32 %s430, 1
          %s1820 = smul.addr %s1819, 56
          %s1821 = scalar_lea.vmem [#allocation2], %s1820
          %1822 = dma.done %s1818, 896
        $region108: #{tpu_custom_call.1} parent=99 // pred_fallthru
          _
      $region100: #{tpu_custom_call.1} parent=5 // pred_fallthru
        _
    $region6: #{tpu_custom_call.1} parent=1 // loop_footer
      %s32 = sadd.s32 1, %s28
    $region7: #{tpu_custom_call.1} parent=1 // loop_footer_branch
      %27 = sbr.rel target = $region3
    $region8: #{tpu_custom_call.1} parent=1 // loop_exit
      _
    %1823 = vsyncpa [#allocation3], 1
    %s1824 = scalar_lea.sflag [#allocation3], 1
    %1825 = vsyncpa %s1824, 1

</llo_original>
